<compile_context>
chip_gen: v6e
topology: v6e:2x2x1
jax: 0.10.0
libtpu: 0.0.40
codegen_flags: <defaults>
</compile_context>

<pallas_src>
import functools

import jax
import jax.numpy as jnp
import numpy as np
from jax import lax
from jax.experimental import pallas as pl
from jax.experimental.pallas import tpu as pltpu


def cross_attention_kernel(xq_ref, xk_ref, xv_ref, wq_ref, wk_ref, wv_ref,
                           wp_ref, bp_ref, o_ref, ctx_ref, *, num_heads, scale):
    # One batch element per grid step.
    xq = xq_ref[0].astype(jnp.float32)        # (N, C)
    xk = xk_ref[0].astype(jnp.float32)        # (K, C)
    xv = xv_ref[0].astype(jnp.float32)        # (K, V)

    # QKV projections on the MXU (weights already transposed to (in, out)).
    q = jnp.dot(xq, wq_ref[...], preferred_element_type=jnp.float32)    # (N, C)
    k = jnp.dot(xk, wk_ref[...], preferred_element_type=jnp.float32)    # (K, C)
    v = jnp.dot(xv, wv_ref[...], preferred_element_type=jnp.float32)    # (K, V)

    n, c = q.shape
    vdim = v.shape[-1]
    hd = c // num_heads
    vhd = vdim // num_heads

    # Static (unrolled) per-head loop; each head is a contiguous lane slice.
    for h in range(num_heads):
        q_h = q[:, h * hd:(h + 1) * hd]       # (N, hd)
        k_h = k[:, h * hd:(h + 1) * hd]       # (K, hd)
        v_h = v[:, h * vhd:(h + 1) * vhd]     # (K, vhd)

        # scores = q_h @ k_h^T (contract over head_dim, no explicit transpose)
        s = lax.dot_general(q_h, k_h, (((1,), (1,)), ((), ())),
                            preferred_element_type=jnp.float32) * scale  # (N, K)

        # softmax over the key axis (max-subtracted; divide -> EUP reciprocal)
        m = jnp.max(s, axis=-1, keepdims=True)
        e = jnp.exp(s - m)
        denom = jnp.sum(e, axis=-1, keepdims=True)
        p = e * pl.reciprocal(denom, approx=False)

        ctx_ref[:, h * vhd:(h + 1) * vhd] = jnp.dot(
            p, v_h, preferred_element_type=jnp.float32)                  # (N, vhd)

    # Output projection: (N, V) @ (V, C) + (1, C).
    out = jnp.dot(ctx_ref[...], wp_ref[...],
                  preferred_element_type=jnp.float32) + bp_ref[...]
    o_ref[0] = out.astype(o_ref.dtype)
    # TODO(synk): attn_drop / proj_drop are p=0.0 (identity) in the module
    # defaults, so no dropout is applied here.


def cross_attention(xq, xk, xv, wq, wk, wv, wp, bp, *, num_heads, qk_scale=None):
    B, N, C = xq.shape
    KV = xk.shape[1]
    V = xv.shape[-1]
    assert C % num_heads == 0 and V % num_heads == 0
    scale = qk_scale if qk_scale is not None else (C // num_heads) ** (-0.5)

    kernel = functools.partial(cross_attention_kernel,
                               num_heads=num_heads, scale=scale)

    grid_spec = pltpu.PrefetchScalarGridSpec(
        num_scalar_prefetch=0,
        grid=(B,),
        in_specs=[
            pl.BlockSpec((1, N, C), lambda b: (b, 0, 0)),    # xq
            pl.BlockSpec((1, KV, C), lambda b: (b, 0, 0)),   # xk
            pl.BlockSpec((1, KV, V), lambda b: (b, 0, 0)),   # xv
            pl.BlockSpec((C, C), lambda b: (0, 0)),          # wq (resident)
            pl.BlockSpec((C, C), lambda b: (0, 0)),          # wk (resident)
            pl.BlockSpec((V, V), lambda b: (0, 0)),          # wv (resident)
            pl.BlockSpec((V, C), lambda b: (0, 0)),          # wp (resident)
            pl.BlockSpec((1, C), lambda b: (0, 0)),          # proj bias
        ],
        out_specs=pl.BlockSpec((1, N, C), lambda b: (b, 0, 0)),
        scratch_shapes=[pltpu.VMEM((N, V), jnp.float32)],    # concat-heads buffer
    )

    return pl.pallas_call(
        kernel,
        out_shape=jax.ShapeDtypeStruct((B, N, C), xq.dtype),
        grid_spec=grid_spec,
        compiler_params=pltpu.CompilerParams(
            dimension_semantics=("parallel",)),
    )(xq, xk, xv, wq, wk, wv, wp, bp)


def cross_attention_ref(xq, xk, xv, wq, wk, wv, wp, bp, *, num_heads, qk_scale=None):
    B, N, C = xq.shape
    KV = xk.shape[1]
    V = xv.shape[-1]
    hd = C // num_heads
    vhd = V // num_heads
    scale = qk_scale if qk_scale is not None else hd ** (-0.5)
    q = (xq @ wq).reshape(B, N, num_heads, hd).transpose(0, 2, 1, 3)
    k = (xk @ wk).reshape(B, KV, num_heads, hd).transpose(0, 2, 1, 3)
    v = (xv @ wv).reshape(B, KV, num_heads, vhd).transpose(0, 2, 1, 3)
    attn = jnp.einsum('bhnd,bhkd->bhnk', q, k) * scale
    attn = jax.nn.softmax(attn, axis=-1)
    x = jnp.einsum('bhnk,bhkv->bhnv', attn, v).transpose(0, 2, 1, 3).reshape(B, N, V)
    return x @ wp + bp


if __name__ == "__main__":
    # Small shapes consistent with the module: dim=32, v_dim=64, 4 heads,
    # 8 query tokens, kv_num=16, batch=2.
    B, N, KV, DIM, VDIM, HEADS = 2, 8, 16, 32, 64, 4

    key = jax.random.PRNGKey(0)
    kq, kk, kv_, kwq, kwk, kwv, kwp, kbp = jax.random.split(key, 8)

    xq = jax.random.normal(kq, (B, N, DIM), dtype=jnp.float32)
    xk = jax.random.normal(kk, (B, KV, DIM), dtype=jnp.float32)
    xv = jax.random.normal(kv_, (B, KV, VDIM), dtype=jnp.float32)

    # nn.Linear weights, stored transposed as (in, out); standard init scale.
    sq = 1.0 / np.sqrt(DIM)
    sv = 1.0 / np.sqrt(VDIM)
    wq = jax.random.uniform(kwq, (DIM, DIM), jnp.float32, -sq, sq)
    wk = jax.random.uniform(kwk, (DIM, DIM), jnp.float32, -sq, sq)
    wv = jax.random.uniform(kwv, (VDIM, VDIM), jnp.float32, -sv, sv)
    wp = jax.random.uniform(kwp, (VDIM, DIM), jnp.float32, -sv, sv)
    bp = jax.random.uniform(kbp, (1, DIM), jnp.float32, -sv, sv)

    out = cross_attention(xq, xk, xv, wq, wk, wv, wp, bp, num_heads=HEADS)
    out = jax.block_until_ready(out)

    ref = cross_attention_ref(xq, xk, xv, wq, wk, wv, wp, bp, num_heads=HEADS)
    np.testing.assert_allclose(np.asarray(out), np.asarray(ref), rtol=1e-4, atol=1e-4)

    print("KERNEL_OK")
</pallas_src>

<mosaic_0001>
module attributes {stable_mosaic.version = 11 : i64} {
  func.func @cross_attention_kernel(%arg0: i32, %arg1: memref<1x8x32xf32, #tpu.memory_space<vmem>>, %arg2: memref<1x16x32xf32, #tpu.memory_space<vmem>>, %arg3: memref<1x16x64xf32, #tpu.memory_space<vmem>>, %arg4: memref<32x32xf32, #tpu.memory_space<vmem>>, %arg5: memref<32x32xf32, #tpu.memory_space<vmem>>, %arg6: memref<64x64xf32, #tpu.memory_space<vmem>>, %arg7: memref<64x32xf32, #tpu.memory_space<vmem>>, %arg8: memref<1x32xf32, #tpu.memory_space<vmem>>, %arg9: memref<1x8x32xf32, #tpu.memory_space<vmem>>, %arg10: memref<8x64xf32, #tpu.memory_space<vmem>>) attributes {dimension_semantics = [#tpu.dimension_semantics<parallel>], iteration_bounds = array<i64: 2>, scalar_prefetch = 0 : i64, scratch_operands = 1 : i64, tpu.core_type = #tpu.core_type<tc>, window_params = [{transform_indices = @transform_0, window_bounds = array<i64: 1, 8, 32>}, {transform_indices = @transform_1, window_bounds = array<i64: 1, 16, 32>}, {transform_indices = @transform_2, window_bounds = array<i64: 1, 16, 64>}, {pipeline_mode = #tpu.pipeline_mode<synchronous>, transform_indices = @transform_3, window_bounds = array<i64: 32, 32>}, {pipeline_mode = #tpu.pipeline_mode<synchronous>, transform_indices = @transform_4, window_bounds = array<i64: 32, 32>}, {pipeline_mode = #tpu.pipeline_mode<synchronous>, transform_indices = @transform_5, window_bounds = array<i64: 64, 64>}, {pipeline_mode = #tpu.pipeline_mode<synchronous>, transform_indices = @transform_6, window_bounds = array<i64: 64, 32>}, {pipeline_mode = #tpu.pipeline_mode<synchronous>, transform_indices = @transform_7, window_bounds = array<i64: 1, 32>}, {transform_indices = @transform_8, window_bounds = array<i64: 1, 8, 32>}]} {
    %c0 = arith.constant 0 : index
    %c0_0 = arith.constant 0 : index
    %c0_1 = arith.constant 0 : index
    %0 = vector.load %arg1[%c0, %c0_0, %c0_1] : memref<1x8x32xf32, #tpu.memory_space<vmem>>, vector<1x8x32xf32>
    %1 = vector.shape_cast %0 : vector<1x8x32xf32> to vector<8x32xf32>
    %c0_2 = arith.constant 0 : index
    %c0_3 = arith.constant 0 : index
    %c0_4 = arith.constant 0 : index
    %2 = vector.load %arg2[%c0_2, %c0_3, %c0_4] : memref<1x16x32xf32, #tpu.memory_space<vmem>>, vector<1x16x32xf32>
    %3 = vector.shape_cast %2 : vector<1x16x32xf32> to vector<16x32xf32>
    %c0_5 = arith.constant 0 : index
    %c0_6 = arith.constant 0 : index
    %c0_7 = arith.constant 0 : index
    %4 = vector.load %arg3[%c0_5, %c0_6, %c0_7] : memref<1x16x64xf32, #tpu.memory_space<vmem>>, vector<1x16x64xf32>
    %5 = vector.shape_cast %4 : vector<1x16x64xf32> to vector<16x64xf32>
    %c0_8 = arith.constant 0 : index
    %c0_9 = arith.constant 0 : index
    %6 = vector.load %arg4[%c0_8, %c0_9] : memref<32x32xf32, #tpu.memory_space<vmem>>, vector<32x32xf32>
    %cst = arith.constant dense<0.000000e+00> : vector<8x32xf32>
    %7 = tpu.matmul %1, %6, %cst {dimension_numbers = #tpu.dot_dimension_numbers<[1], [0], [0], [1], [0, 0, 1, 1], [], []>} : vector<8x32xf32>, vector<32x32xf32>, vector<8x32xf32> -> vector<8x32xf32>
    %c0_10 = arith.constant 0 : index
    %c0_11 = arith.constant 0 : index
    %8 = vector.load %arg5[%c0_10, %c0_11] : memref<32x32xf32, #tpu.memory_space<vmem>>, vector<32x32xf32>
    %cst_12 = arith.constant dense<0.000000e+00> : vector<16x32xf32>
    %9 = tpu.matmul %3, %8, %cst_12 {dimension_numbers = #tpu.dot_dimension_numbers<[1], [0], [0], [1], [0, 0, 1, 1], [], []>} : vector<16x32xf32>, vector<32x32xf32>, vector<16x32xf32> -> vector<16x32xf32>
    %c0_13 = arith.constant 0 : index
    %c0_14 = arith.constant 0 : index
    %10 = vector.load %arg6[%c0_13, %c0_14] : memref<64x64xf32, #tpu.memory_space<vmem>>, vector<64x64xf32>
    %cst_15 = arith.constant dense<0.000000e+00> : vector<16x64xf32>
    %11 = tpu.matmul %5, %10, %cst_15 {dimension_numbers = #tpu.dot_dimension_numbers<[1], [0], [0], [1], [0, 0, 1, 1], [], []>} : vector<16x64xf32>, vector<64x64xf32>, vector<16x64xf32> -> vector<16x64xf32>
    %12 = vector.extract_strided_slice %7 {offsets = [0, 0], sizes = [8, 8], strides = [1, 1]} : vector<8x32xf32> to vector<8x8xf32>
    %13 = vector.extract_strided_slice %9 {offsets = [0, 0], sizes = [16, 8], strides = [1, 1]} : vector<16x32xf32> to vector<16x8xf32>
    %14 = vector.extract_strided_slice %11 {offsets = [0, 0], sizes = [16, 16], strides = [1, 1]} : vector<16x64xf32> to vector<16x16xf32>
    %cst_16 = arith.constant dense<0.000000e+00> : vector<8x16xf32>
    %15 = tpu.matmul %12, %13, %cst_16 {dimension_numbers = #tpu.dot_dimension_numbers<[1], [1], [0], [0], [0, 0, 1, 0], [], []>} : vector<8x8xf32>, vector<16x8xf32>, vector<8x16xf32> -> vector<8x16xf32>
    %cst_17 = arith.constant 0.353553385 : f32
    %16 = vector.broadcast %cst_17 : f32 to vector<8x16xf32>
    %17 = arith.mulf %15, %16 : vector<8x16xf32>
    %cst_18 = arith.constant dense<0xFF800000> : vector<8xf32>
    %18 = vector.multi_reduction <maximumf>, %17, %cst_18 [1] : vector<8x16xf32> to vector<8xf32>
    %19 = vector.shape_cast %18 : vector<8xf32> to vector<8x1xf32>
    %20 = vector.broadcast %19 : vector<8x1xf32> to vector<8x16xf32>
    %21 = arith.subf %17, %20 : vector<8x16xf32>
    %22 = math.exp %21 : vector<8x16xf32>
    %cst_19 = arith.constant dense<0.000000e+00> : vector<8xf32>
    %23 = vector.multi_reduction <add>, %22, %cst_19 [1] : vector<8x16xf32> to vector<8xf32>
    %24 = vector.shape_cast %23 : vector<8xf32> to vector<8x1xf32>
    %25 = tpu.reciprocal %24 : vector<8x1xf32> -> vector<8x1xf32>
    %26 = vector.broadcast %25 : vector<8x1xf32> to vector<8x16xf32>
    %27 = arith.mulf %22, %26 : vector<8x16xf32>
    %cst_20 = arith.constant dense<0.000000e+00> : vector<8x16xf32>
    %28 = tpu.matmul %27, %14, %cst_20 {dimension_numbers = #tpu.dot_dimension_numbers<[1], [0], [0], [1], [0, 0, 1, 1], [], []>} : vector<8x16xf32>, vector<16x16xf32>, vector<8x16xf32> -> vector<8x16xf32>
    %c0_21 = arith.constant 0 : index
    %c0_22 = arith.constant 0 : index
    %29 = vector.load %arg10[%c0_21, %c0_22] : memref<8x64xf32, #tpu.memory_space<vmem>>, vector<8x16xf32>
    tpu.vector_store %arg10[%c0_21, %c0_22], %28 {strides = array<i32>} : memref<8x64xf32, #tpu.memory_space<vmem>>, vector<8x16xf32>,
    %30 = vector.extract_strided_slice %7 {offsets = [0, 8], sizes = [8, 8], strides = [1, 1]} : vector<8x32xf32> to vector<8x8xf32>
    %31 = vector.extract_strided_slice %9 {offsets = [0, 8], sizes = [16, 8], strides = [1, 1]} : vector<16x32xf32> to vector<16x8xf32>
    %32 = vector.extract_strided_slice %11 {offsets = [0, 16], sizes = [16, 16], strides = [1, 1]} : vector<16x64xf32> to vector<16x16xf32>
    %cst_23 = arith.constant dense<0.000000e+00> : vector<8x16xf32>
    %33 = tpu.matmul %30, %31, %cst_23 {dimension_numbers = #tpu.dot_dimension_numbers<[1], [1], [0], [0], [0, 0, 1, 0], [], []>} : vector<8x8xf32>, vector<16x8xf32>, vector<8x16xf32> -> vector<8x16xf32>
    %cst_24 = arith.constant 0.353553385 : f32
    %34 = vector.broadcast %cst_24 : f32 to vector<8x16xf32>
    %35 = arith.mulf %33, %34 : vector<8x16xf32>
    %cst_25 = arith.constant dense<0xFF800000> : vector<8xf32>
    %36 = vector.multi_reduction <maximumf>, %35, %cst_25 [1] : vector<8x16xf32> to vector<8xf32>
    %37 = vector.shape_cast %36 : vector<8xf32> to vector<8x1xf32>
    %38 = vector.broadcast %37 : vector<8x1xf32> to vector<8x16xf32>
    %39 = arith.subf %35, %38 : vector<8x16xf32>
    %40 = math.exp %39 : vector<8x16xf32>
    %cst_26 = arith.constant dense<0.000000e+00> : vector<8xf32>
    %41 = vector.multi_reduction <add>, %40, %cst_26 [1] : vector<8x16xf32> to vector<8xf32>
    %42 = vector.shape_cast %41 : vector<8xf32> to vector<8x1xf32>
    %43 = tpu.reciprocal %42 : vector<8x1xf32> -> vector<8x1xf32>
    %44 = vector.broadcast %43 : vector<8x1xf32> to vector<8x16xf32>
    %45 = arith.mulf %40, %44 : vector<8x16xf32>
    %cst_27 = arith.constant dense<0.000000e+00> : vector<8x16xf32>
    %46 = tpu.matmul %45, %32, %cst_27 {dimension_numbers = #tpu.dot_dimension_numbers<[1], [0], [0], [1], [0, 0, 1, 1], [], []>} : vector<8x16xf32>, vector<16x16xf32>, vector<8x16xf32> -> vector<8x16xf32>
    %c0_28 = arith.constant 0 : index
    %c16 = arith.constant 16 : index
    %47 = vector.load %arg10[%c0_28, %c16] : memref<8x64xf32, #tpu.memory_space<vmem>>, vector<8x16xf32>
    tpu.vector_store %arg10[%c0_28, %c16], %46 {strides = array<i32>} : memref<8x64xf32, #tpu.memory_space<vmem>>, vector<8x16xf32>,
    %48 = vector.extract_strided_slice %7 {offsets = [0, 16], sizes = [8, 8], strides = [1, 1]} : vector<8x32xf32> to vector<8x8xf32>
    %49 = vector.extract_strided_slice %9 {offsets = [0, 16], sizes = [16, 8], strides = [1, 1]} : vector<16x32xf32> to vector<16x8xf32>
    %50 = vector.extract_strided_slice %11 {offsets = [0, 32], sizes = [16, 16], strides = [1, 1]} : vector<16x64xf32> to vector<16x16xf32>
    %cst_29 = arith.constant dense<0.000000e+00> : vector<8x16xf32>
    %51 = tpu.matmul %48, %49, %cst_29 {dimension_numbers = #tpu.dot_dimension_numbers<[1], [1], [0], [0], [0, 0, 1, 0], [], []>} : vector<8x8xf32>, vector<16x8xf32>, vector<8x16xf32> -> vector<8x16xf32>
    %cst_30 = arith.constant 0.353553385 : f32
    %52 = vector.broadcast %cst_30 : f32 to vector<8x16xf32>
    %53 = arith.mulf %51, %52 : vector<8x16xf32>
    %cst_31 = arith.constant dense<0xFF800000> : vector<8xf32>
    %54 = vector.multi_reduction <maximumf>, %53, %cst_31 [1] : vector<8x16xf32> to vector<8xf32>
    %55 = vector.shape_cast %54 : vector<8xf32> to vector<8x1xf32>
    %56 = vector.broadcast %55 : vector<8x1xf32> to vector<8x16xf32>
    %57 = arith.subf %53, %56 : vector<8x16xf32>
    %58 = math.exp %57 : vector<8x16xf32>
    %cst_32 = arith.constant dense<0.000000e+00> : vector<8xf32>
    %59 = vector.multi_reduction <add>, %58, %cst_32 [1] : vector<8x16xf32> to vector<8xf32>
    %60 = vector.shape_cast %59 : vector<8xf32> to vector<8x1xf32>
    %61 = tpu.reciprocal %60 : vector<8x1xf32> -> vector<8x1xf32>
    %62 = vector.broadcast %61 : vector<8x1xf32> to vector<8x16xf32>
    %63 = arith.mulf %58, %62 : vector<8x16xf32>
    %cst_33 = arith.constant dense<0.000000e+00> : vector<8x16xf32>
    %64 = tpu.matmul %63, %50, %cst_33 {dimension_numbers = #tpu.dot_dimension_numbers<[1], [0], [0], [1], [0, 0, 1, 1], [], []>} : vector<8x16xf32>, vector<16x16xf32>, vector<8x16xf32> -> vector<8x16xf32>
    %c0_34 = arith.constant 0 : index
    %c32 = arith.constant 32 : index
    %65 = vector.load %arg10[%c0_34, %c32] : memref<8x64xf32, #tpu.memory_space<vmem>>, vector<8x16xf32>
    tpu.vector_store %arg10[%c0_34, %c32], %64 {strides = array<i32>} : memref<8x64xf32, #tpu.memory_space<vmem>>, vector<8x16xf32>,
    %66 = vector.extract_strided_slice %7 {offsets = [0, 24], sizes = [8, 8], strides = [1, 1]} : vector<8x32xf32> to vector<8x8xf32>
    %67 = vector.extract_strided_slice %9 {offsets = [0, 24], sizes = [16, 8], strides = [1, 1]} : vector<16x32xf32> to vector<16x8xf32>
    %68 = vector.extract_strided_slice %11 {offsets = [0, 48], sizes = [16, 16], strides = [1, 1]} : vector<16x64xf32> to vector<16x16xf32>
    %cst_35 = arith.constant dense<0.000000e+00> : vector<8x16xf32>
    %69 = tpu.matmul %66, %67, %cst_35 {dimension_numbers = #tpu.dot_dimension_numbers<[1], [1], [0], [0], [0, 0, 1, 0], [], []>} : vector<8x8xf32>, vector<16x8xf32>, vector<8x16xf32> -> vector<8x16xf32>
    %cst_36 = arith.constant 0.353553385 : f32
    %70 = vector.broadcast %cst_36 : f32 to vector<8x16xf32>
    %71 = arith.mulf %69, %70 : vector<8x16xf32>
    %cst_37 = arith.constant dense<0xFF800000> : vector<8xf32>
    %72 = vector.multi_reduction <maximumf>, %71, %cst_37 [1] : vector<8x16xf32> to vector<8xf32>
    %73 = vector.shape_cast %72 : vector<8xf32> to vector<8x1xf32>
    %74 = vector.broadcast %73 : vector<8x1xf32> to vector<8x16xf32>
    %75 = arith.subf %71, %74 : vector<8x16xf32>
    %76 = math.exp %75 : vector<8x16xf32>
    %cst_38 = arith.constant dense<0.000000e+00> : vector<8xf32>
    %77 = vector.multi_reduction <add>, %76, %cst_38 [1] : vector<8x16xf32> to vector<8xf32>
    %78 = vector.shape_cast %77 : vector<8xf32> to vector<8x1xf32>
    %79 = tpu.reciprocal %78 : vector<8x1xf32> -> vector<8x1xf32>
    %80 = vector.broadcast %79 : vector<8x1xf32> to vector<8x16xf32>
    %81 = arith.mulf %76, %80 : vector<8x16xf32>
    %cst_39 = arith.constant dense<0.000000e+00> : vector<8x16xf32>
    %82 = tpu.matmul %81, %68, %cst_39 {dimension_numbers = #tpu.dot_dimension_numbers<[1], [0], [0], [1], [0, 0, 1, 1], [], []>} : vector<8x16xf32>, vector<16x16xf32>, vector<8x16xf32> -> vector<8x16xf32>
    %c0_40 = arith.constant 0 : index
    %c48 = arith.constant 48 : index
    %83 = vector.load %arg10[%c0_40, %c48] : memref<8x64xf32, #tpu.memory_space<vmem>>, vector<8x16xf32>
    tpu.vector_store %arg10[%c0_40, %c48], %82 {strides = array<i32>} : memref<8x64xf32, #tpu.memory_space<vmem>>, vector<8x16xf32>,
    %c0_41 = arith.constant 0 : index
    %c0_42 = arith.constant 0 : index
    %84 = vector.load %arg10[%c0_41, %c0_42] : memref<8x64xf32, #tpu.memory_space<vmem>>, vector<8x64xf32>
    %c0_43 = arith.constant 0 : index
    %c0_44 = arith.constant 0 : index
    %85 = vector.load %arg7[%c0_43, %c0_44] : memref<64x32xf32, #tpu.memory_space<vmem>>, vector<64x32xf32>
    %cst_45 = arith.constant dense<0.000000e+00> : vector<8x32xf32>
    %86 = tpu.matmul %84, %85, %cst_45 {dimension_numbers = #tpu.dot_dimension_numbers<[1], [0], [0], [1], [0, 0, 1, 1], [], []>} : vector<8x64xf32>, vector<64x32xf32>, vector<8x32xf32> -> vector<8x32xf32>
    %c0_46 = arith.constant 0 : index
    %c0_47 = arith.constant 0 : index
    %87 = vector.load %arg8[%c0_46, %c0_47] : memref<1x32xf32, #tpu.memory_space<vmem>>, vector<1x32xf32>
    %88 = vector.broadcast %87 : vector<1x32xf32> to vector<8x32xf32>
    %89 = arith.addf %86, %88 : vector<8x32xf32>
    %c0_48 = arith.constant 0 : index
    %c0_49 = arith.constant 0 : index
    %c0_50 = arith.constant 0 : index
    %90 = vector.load %arg9[%c0_48, %c0_49, %c0_50] : memref<1x8x32xf32, #tpu.memory_space<vmem>>, vector<1x8x32xf32>
    %91 = vector.shape_cast %90 : vector<1x8x32xf32> to vector<8x32xf32>
    %92 = vector.shape_cast %89 : vector<8x32xf32> to vector<1x8x32xf32>
    tpu.vector_store %arg9[%c0_48, %c0_49, %c0_50], %92 {strides = array<i32>} : memref<1x8x32xf32, #tpu.memory_space<vmem>>, vector<1x8x32xf32>,
    return
  }
  func.func @transform_0(%arg0: i32) -> (i32, i32, i32) {
    %c0_i32 = arith.constant 0 : i32
    %c0_i32_0 = arith.constant 0 : i32
    %c0_i32_1 = arith.constant 0 : i32
    return %arg0, %c0_i32, %c0_i32_0 : i32, i32, i32
  }
  func.func @transform_1(%arg0: i32) -> (i32, i32, i32) {
    %c0_i32 = arith.constant 0 : i32
    %c0_i32_0 = arith.constant 0 : i32
    %c0_i32_1 = arith.constant 0 : i32
    return %arg0, %c0_i32, %c0_i32_0 : i32, i32, i32
  }
  func.func @transform_2(%arg0: i32) -> (i32, i32, i32) {
    %c0_i32 = arith.constant 0 : i32
    %c0_i32_0 = arith.constant 0 : i32
    %c0_i32_1 = arith.constant 0 : i32
    return %arg0, %c0_i32, %c0_i32_0 : i32, i32, i32
  }
  func.func @transform_3(%arg0: i32) -> (i32, i32) {
    %c0_i32 = arith.constant 0 : i32
    %c0_i32_0 = arith.constant 0 : i32
    %c0_i32_1 = arith.constant 0 : i32
    return %c0_i32, %c0_i32_0 : i32, i32
  }
  func.func @transform_4(%arg0: i32) -> (i32, i32) {
    %c0_i32 = arith.constant 0 : i32
    %c0_i32_0 = arith.constant 0 : i32
    %c0_i32_1 = arith.constant 0 : i32
    return %c0_i32, %c0_i32_0 : i32, i32
  }
  func.func @transform_5(%arg0: i32) -> (i32, i32) {
    %c0_i32 = arith.constant 0 : i32
    %c0_i32_0 = arith.constant 0 : i32
    %c0_i32_1 = arith.constant 0 : i32
    return %c0_i32, %c0_i32_0 : i32, i32
  }
  func.func @transform_6(%arg0: i32) -> (i32, i32) {
    %c0_i32 = arith.constant 0 : i32
    %c0_i32_0 = arith.constant 0 : i32
    %c0_i32_1 = arith.constant 0 : i32
    return %c0_i32, %c0_i32_0 : i32, i32
  }
  func.func @transform_7(%arg0: i32) -> (i32, i32) {
    %c0_i32 = arith.constant 0 : i32
    %c0_i32_0 = arith.constant 0 : i32
    %c0_i32_1 = arith.constant 0 : i32
    return %c0_i32, %c0_i32_0 : i32, i32
  }
  func.func @transform_8(%arg0: i32) -> (i32, i32, i32) {
    %c0_i32 = arith.constant 0 : i32
    %c0_i32_0 = arith.constant 0 : i32
    %c0_i32_1 = arith.constant 0 : i32
    return %arg0, %c0_i32, %c0_i32_0 : i32, i32, i32
  }
}

</mosaic_0001>

<llo_original>
// kernel: tpu_custom_call.1
$region0: #{tpu_custom_call.1}
  #allocation0 [shape = 'u32[]', space=smem, size = 0x4, offset = 0x4, fixed_abs, tag = 'smem constant byte address 0x4 - core index']
  #allocation1 [shape = 'u32[144,128]{1,0:T(1,128)}', space=vmem, size = 0x12000, scoped, tag = 'internal scratch']
  #allocation2 [shape = 'f32[8,64]{1,0:T(8,128)}', space=vmem, size = 0x1000, scoped, tag = 'scratch operand']
  %s0 = inlined_call_operand.hbm [shape: f32[2,8,32], index: 0, kind: input, shape index: {}]
  %s1 = inlined_call_operand.vmem [shape: f32[2,16,32], index: 1, kind: input, shape index: {}]
  %s2 = inlined_call_operand.hbm [shape: f32[2,16,64], index: 2, kind: input, shape index: {}]
  %s3 = inlined_call_operand.hbm [shape: f32[32,32], index: 3, kind: input, shape index: {}]
  %s4 = inlined_call_operand.hbm [shape: f32[32,32], index: 4, kind: input, shape index: {}]
  %s5 = inlined_call_operand.vmem [shape: f32[64,64], index: 5, kind: input, shape index: {}]
  %s6 = inlined_call_operand.vmem [shape: f32[64,32], index: 6, kind: input, shape index: {}]
  %s7 = inlined_call_operand.vmem [shape: f32[1,32], index: 7, kind: input, shape index: {}]
  %s8 = inlined_call_operand.hbm [shape: f32[2,8,32], index: 8, kind: output, shape index: {}]
  %s9 = sld [smem:[#allocation0]]
  $region81: #{tpu_custom_call.1} parent=0
    _
  %s11 = ssub.s32 1, %s9
  %s12 = scalar_select 0, %s11, %s9
  $region1: #{tpu_custom_call.1} parent=0
    #allocation3 [shape = 'u8[8192]{0}', space=vmem, size = 0x2000, scoped, tag = 'input window, operand 0']
    #allocation4 [shape = 's32[2]{0}', space=sflag, size = 0x8, scoped, tag = 'scoped memory for tpu_custom_call.1']
    #allocation5 [shape = 's32[2]{0}', space=sflag, size = 0x8, scoped, tag = 'scoped memory for tpu_custom_call.1']
    #allocation6 [shape = 'u8[16384]{0}', space=vmem, size = 0x4000, scoped, tag = 'input window, operand 2']
    #allocation7 [shape = 's32[2]{0}', space=sflag, size = 0x8, scoped, tag = 'scoped memory for tpu_custom_call.1']
    #allocation8 [shape = 'u8[16384]{0}', space=vmem, size = 0x4000, scoped, tag = 'input window, operand 3, single buffered']
    #allocation9 [shape = 'u8[16384]{0}', space=vmem, size = 0x4000, scoped, tag = 'input window, operand 4, single buffered']
    #allocation10 [shape = 's32[1]{0}', space=sflag, size = 0x4, scoped, tag = 'scoped memory for tpu_custom_call.1']
    #allocation11 [shape = 'u8[8192]{0}', space=vmem, size = 0x2000, scoped, tag = 'output window, operand 0']
    %13 = vsyncpa [#allocation4], 0
    %s14 = scalar_lea.sflag [#allocation4], 1
    %15 = vsyncpa %s14, 0
    %16 = vsyncpa [#allocation7], 0
    %s17 = scalar_lea.sflag [#allocation7], 1
    %18 = vsyncpa %s17, 0
    %19 = vsyncpa [#allocation10], 0
    %20 = vsyncpa [#allocation5], 0
    %s21 = scalar_lea.sflag [#allocation5], 1
    %22 = vsyncpa %s21, 0
    loop: start=0, step=1, limit=4
    $region2: #{tpu_custom_call.1} parent=1 // loop_pre_header
      _
    $region3: #{tpu_custom_call.1} parent=1 // loop_header
      %s24 = sphi 0, %s28
      %p25 = scmp.ge.s32.totalorder %s24, 4
      %s34 = sphi 0, %s36
      %s37 = sphi 0, %s34
      %s38 = sphi 0, %s37
      %s54 = sphi 0, %s38
      %s60 = sphi 0, %s62
      %s63 = sphi 0, %s60
      %s64 = sphi 0, %s63
      %s80 = sphi 0, %s64
      %s86 = sphi 0, %s88
      %s89 = sphi 0, %s86
      %s90 = sphi 0, %s89
      %s106 = sphi 0, %s90
      %s110 = sphi 0, %s110
      %s112 = sphi 0, %s110
      %s113 = sphi 0, %s112
      %s127 = sphi 0, %s113
      %s131 = sphi 0, %s131
      %s133 = sphi 0, %s131
      %s134 = sphi 0, %s133
      %s148 = sphi 0, %s134
      %s152 = sphi 0, %s152
      %s154 = sphi 0, %s152
      %s155 = sphi 0, %s154
      %s169 = sphi 0, %s155
      %s173 = sphi 0, %s173
      %s175 = sphi 0, %s173
      %s176 = sphi 0, %s175
      %s190 = sphi 0, %s176
      %s194 = sphi 0, %s194
      %s196 = sphi 0, %s194
      %s197 = sphi 0, %s196
      %s211 = sphi 0, %s197
      %s217 = sphi 0, %s219
      %s220 = sphi 0, %s217
      %s221 = sphi 0, %s220
      %s237 = sphi 0, %s221
    $region4: #{tpu_custom_call.1} parent=1 // loop_header_branch
      %27 = sbr.rel (%p25) target = $region8
    $region5: #{tpu_custom_call.1} parent=1 // loop_body
      %s29 = ssub.s32 %s24, 1
      %s30 = ssub.s32 %s24, 2
      %s31 = sadd.s32 %s24, 1
      %s32 = ssub.s32 %s24, %s31
      %p33 = scmp.eq.s32.totalorder %s32, 0
      %s35 = sadd.s32 %s34, 1
      %s36 = scalar_select %p33, %s34, %s35
      %p39 = pneg %p33
      %p40 = scmp.eq.s32.totalorder %s24, 1
      %p41 = por %p39, %p40
      %p42 = scmp.ne.s32.totalorder %s34, %s37
      %p43 = scmp.eq.s32.totalorder %s24, 0
      %p44 = por %p42, %p43
      %p45 = scmp.ne.s32.totalorder %s34, %s37
      %p46 = scmp.eq.s32.totalorder %s29, 1
      %p47 = por %p45, %p46
      %p48 = scmp.ne.s32.totalorder %s37, %s38
      %p49 = scmp.eq.s32.totalorder %s29, 0
      %p50 = por %p48, %p49
      %p51 = scmp.ne.s32.totalorder %s37, %s38
      %p52 = scmp.eq.s32.totalorder %s30, 1
      %p53 = por %p51, %p52
      %p55 = scmp.ne.s32.totalorder %s38, %s54
      %p56 = scmp.eq.s32.totalorder %s30, 0
      %p57 = por %p55, %p56
      %s58 = ssub.s32 %s24, %s31
      %p59 = scmp.eq.s32.totalorder %s58, 0
      %s61 = sadd.s32 %s60, 1
      %s62 = scalar_select %p59, %s60, %s61
      %p65 = pneg %p59
      %p66 = scmp.eq.s32.totalorder %s24, 1
      %p67 = por %p65, %p66
      %p68 = scmp.ne.s32.totalorder %s60, %s63
      %p69 = scmp.eq.s32.totalorder %s24, 0
      %p70 = por %p68, %p69
      %p71 = scmp.ne.s32.totalorder %s60, %s63
      %p72 = scmp.eq.s32.totalorder %s29, 1
      %p73 = por %p71, %p72
      %p74 = scmp.ne.s32.totalorder %s63, %s64
      %p75 = scmp.eq.s32.totalorder %s29, 0
      %p76 = por %p74, %p75
      %p77 = scmp.ne.s32.totalorder %s63, %s64
      %p78 = scmp.eq.s32.totalorder %s30, 1
      %p79 = por %p77, %p78
      %p81 = scmp.ne.s32.totalorder %s64, %s80
      %p82 = scmp.eq.s32.totalorder %s30, 0
      %p83 = por %p81, %p82
      %s84 = ssub.s32 %s24, %s31
      %p85 = scmp.eq.s32.totalorder %s84, 0
      %s87 = sadd.s32 %s86, 1
      %s88 = scalar_select %p85, %s86, %s87
      %p91 = pneg %p85
      %p92 = scmp.eq.s32.totalorder %s24, 1
      %p93 = por %p91, %p92
      %p94 = scmp.ne.s32.totalorder %s86, %s89
      %p95 = scmp.eq.s32.totalorder %s24, 0
      %p96 = por %p94, %p95
      %p97 = scmp.ne.s32.totalorder %s86, %s89
      %p98 = scmp.eq.s32.totalorder %s29, 1
      %p99 = por %p97, %p98
      %p100 = scmp.ne.s32.totalorder %s89, %s90
      %p101 = scmp.eq.s32.totalorder %s29, 0
      %p102 = por %p100, %p101
      %p103 = scmp.ne.s32.totalorder %s89, %s90
      %p104 = scmp.eq.s32.totalorder %s30, 1
      %p105 = por %p103, %p104
      %p107 = scmp.ne.s32.totalorder %s90, %s106
      %p108 = scmp.eq.s32.totalorder %s30, 0
      %p109 = por %p107, %p108
      %s111 = sadd.s32 %s110, 1
      %p114 = scmp.eq.s32.totalorder %s24, 1
      %p115 = scmp.ne.s32.totalorder %s110, %s112
      %p116 = scmp.eq.s32.totalorder %s24, 0
      %p117 = por %p115, %p116
      %p118 = scmp.ne.s32.totalorder %s110, %s112
      %p119 = scmp.eq.s32.totalorder %s29, 1
      %p120 = por %p118, %p119
      %p121 = scmp.ne.s32.totalorder %s112, %s113
      %p122 = scmp.eq.s32.totalorder %s29, 0
      %p123 = por %p121, %p122
      %p124 = scmp.ne.s32.totalorder %s112, %s113
      %p125 = scmp.eq.s32.totalorder %s30, 1
      %p126 = por %p124, %p125
      %p128 = scmp.ne.s32.totalorder %s113, %s127
      %p129 = scmp.eq.s32.totalorder %s30, 0
      %p130 = por %p128, %p129
      %s132 = sadd.s32 %s131, 1
      %p135 = scmp.eq.s32.totalorder %s24, 1
      %p136 = scmp.ne.s32.totalorder %s131, %s133
      %p137 = scmp.eq.s32.totalorder %s24, 0
      %p138 = por %p136, %p137
      %p139 = scmp.ne.s32.totalorder %s131, %s133
      %p140 = scmp.eq.s32.totalorder %s29, 1
      %p141 = por %p139, %p140
      %p142 = scmp.ne.s32.totalorder %s133, %s134
      %p143 = scmp.eq.s32.totalorder %s29, 0
      %p144 = por %p142, %p143
      %p145 = scmp.ne.s32.totalorder %s133, %s134
      %p146 = scmp.eq.s32.totalorder %s30, 1
      %p147 = por %p145, %p146
      %p149 = scmp.ne.s32.totalorder %s134, %s148
      %p150 = scmp.eq.s32.totalorder %s30, 0
      %p151 = por %p149, %p150
      %s153 = sadd.s32 %s152, 1
      %p156 = scmp.eq.s32.totalorder %s24, 1
      %p157 = scmp.ne.s32.totalorder %s152, %s154
      %p158 = scmp.eq.s32.totalorder %s24, 0
      %p159 = por %p157, %p158
      %p160 = scmp.ne.s32.totalorder %s152, %s154
      %p161 = scmp.eq.s32.totalorder %s29, 1
      %p162 = por %p160, %p161
      %p163 = scmp.ne.s32.totalorder %s154, %s155
      %p164 = scmp.eq.s32.totalorder %s29, 0
      %p165 = por %p163, %p164
      %p166 = scmp.ne.s32.totalorder %s154, %s155
      %p167 = scmp.eq.s32.totalorder %s30, 1
      %p168 = por %p166, %p167
      %p170 = scmp.ne.s32.totalorder %s155, %s169
      %p171 = scmp.eq.s32.totalorder %s30, 0
      %p172 = por %p170, %p171
      %s174 = sadd.s32 %s173, 1
      %p177 = scmp.eq.s32.totalorder %s24, 1
      %p178 = scmp.ne.s32.totalorder %s173, %s175
      %p179 = scmp.eq.s32.totalorder %s24, 0
      %p180 = por %p178, %p179
      %p181 = scmp.ne.s32.totalorder %s173, %s175
      %p182 = scmp.eq.s32.totalorder %s29, 1
      %p183 = por %p181, %p182
      %p184 = scmp.ne.s32.totalorder %s175, %s176
      %p185 = scmp.eq.s32.totalorder %s29, 0
      %p186 = por %p184, %p185
      %p187 = scmp.ne.s32.totalorder %s175, %s176
      %p188 = scmp.eq.s32.totalorder %s30, 1
      %p189 = por %p187, %p188
      %p191 = scmp.ne.s32.totalorder %s176, %s190
      %p192 = scmp.eq.s32.totalorder %s30, 0
      %p193 = por %p191, %p192
      %s195 = sadd.s32 %s194, 1
      %p198 = scmp.eq.s32.totalorder %s24, 1
      %p199 = scmp.ne.s32.totalorder %s194, %s196
      %p200 = scmp.eq.s32.totalorder %s24, 0
      %p201 = por %p199, %p200
      %p202 = scmp.ne.s32.totalorder %s194, %s196
      %p203 = scmp.eq.s32.totalorder %s29, 1
      %p204 = por %p202, %p203
      %p205 = scmp.ne.s32.totalorder %s196, %s197
      %p206 = scmp.eq.s32.totalorder %s29, 0
      %p207 = por %p205, %p206
      %p208 = scmp.ne.s32.totalorder %s196, %s197
      %p209 = scmp.eq.s32.totalorder %s30, 1
      %p210 = por %p208, %p209
      %p212 = scmp.ne.s32.totalorder %s197, %s211
      %p213 = scmp.eq.s32.totalorder %s30, 0
      %p214 = por %p212, %p213
      %s215 = ssub.s32 %s24, %s31
      %p216 = scmp.eq.s32.totalorder %s215, 0
      %s218 = sadd.s32 %s217, 1
      %s219 = scalar_select %p216, %s217, %s218
      %p222 = pneg %p216
      %p223 = scmp.eq.s32.totalorder %s24, 1
      %p224 = por %p222, %p223
      %p225 = scmp.ne.s32.totalorder %s217, %s220
      %p226 = scmp.eq.s32.totalorder %s24, 0
      %p227 = por %p225, %p226
      %p228 = scmp.ne.s32.totalorder %s217, %s220
      %p229 = scmp.eq.s32.totalorder %s29, 1
      %p230 = por %p228, %p229
      %p231 = scmp.ne.s32.totalorder %s220, %s221
      %p232 = scmp.eq.s32.totalorder %s29, 0
      %p233 = por %p231, %p232
      %p234 = scmp.ne.s32.totalorder %s220, %s221
      %p235 = scmp.eq.s32.totalorder %s30, 1
      %p236 = por %p234, %p235
      %p238 = scmp.ne.s32.totalorder %s221, %s237
      %p239 = scmp.eq.s32.totalorder %s30, 0
      %p240 = por %p238, %p239
      %p241 = scmp.le.s32.totalorder 1, %s24
      %p242 = scmp.lt.s32.totalorder %s24, 3
      %p243 = pnand %p241, %p242
      %p244 = pneg %p243
      // Predicated region
      $region9: #{tpu_custom_call.1} parent=5 // pred_check
        _
      $region10: #{tpu_custom_call.1} parent=5 // pred_check_branch
        %246 = sbr.rel (%p243) target = $region12
      $region11: #{tpu_custom_call.1} parent=5 // pred_region
        %s247 = ssub.s32 %s24, 1
        // Predicated region
        $region13: #{tpu_custom_call.1} parent=11 // pred_check
          %p248 = pneg %p123
        $region14: #{tpu_custom_call.1} parent=11 // pred_check_branch
          %250 = sbr.rel (%p248) target = $region16
        $region15: #{tpu_custom_call.1} parent=11 // pred_region
          %s252 = ssub.s32 512, 512
          %253 = vsyncadd [#allocation7], %s252
          %s254 = sshll.u32 [#allocation8], 4
          %s255 = int_to_ptr.vmem [resolvable:$true] %s254
          %260 = dma.hbm_to_vmem [thread:$0]  %s3, 512, %s255, [#allocation7], 128, 128, 8
        $region16: #{tpu_custom_call.1} parent=11 // pred_fallthru
          _
        // Predicated region
        $region17: #{tpu_custom_call.1} parent=11 // pred_check
          %p261 = pneg %p144
        $region18: #{tpu_custom_call.1} parent=11 // pred_check_branch
          %263 = sbr.rel (%p261) target = $region20
        $region19: #{tpu_custom_call.1} parent=11 // pred_region
          %s265 = ssub.s32 512, 512
          %266 = vsyncadd [#allocation10], %s265
          %s267 = sshll.u32 [#allocation9], 4
          %s268 = int_to_ptr.vmem [resolvable:$true] %s267
          %273 = dma.hbm_to_vmem [thread:$0]  %s4, 512, %s268, [#allocation10], 128, 128, 8
        $region20: #{tpu_custom_call.1} parent=11 // pred_fallthru
          _
        // Predicated region
        $region21: #{tpu_custom_call.1} parent=11 // pred_check
          %p274 = pneg %p165
        $region22: #{tpu_custom_call.1} parent=11 // pred_check_branch
          %276 = sbr.rel (%p274) target = $region24
        $region23: #{tpu_custom_call.1} parent=11 // pred_region
          _
        $region24: #{tpu_custom_call.1} parent=11 // pred_fallthru
          _
        // Predicated region
        $region25: #{tpu_custom_call.1} parent=11 // pred_check
          %p277 = pneg %p186
        $region26: #{tpu_custom_call.1} parent=11 // pred_check_branch
          %279 = sbr.rel (%p277) target = $region28
        $region27: #{tpu_custom_call.1} parent=11 // pred_region
          _
        $region28: #{tpu_custom_call.1} parent=11 // pred_fallthru
          _
        // Predicated region
        $region29: #{tpu_custom_call.1} parent=11 // pred_check
          %p280 = pneg %p207
        $region30: #{tpu_custom_call.1} parent=11 // pred_check_branch
          %282 = sbr.rel (%p280) target = $region32
        $region31: #{tpu_custom_call.1} parent=11 // pred_region
          _
        $region32: #{tpu_custom_call.1} parent=11 // pred_fallthru
          _
      $region12: #{tpu_custom_call.1} parent=5 // pred_fallthru
        _
      %p283 = scmp.lt.s32.totalorder %s24, 2
      // Predicated region
      $region33: #{tpu_custom_call.1} parent=5 // pred_check
        %p284 = pneg %p283
      $region34: #{tpu_custom_call.1} parent=5 // pred_check_branch
        %286 = sbr.rel (%p284) target = $region36
      $region35: #{tpu_custom_call.1} parent=5 // pred_region
        // Predicated region
        $region37: #{tpu_custom_call.1} parent=35 // pred_check
          %p287 = pneg %p44
        $region38: #{tpu_custom_call.1} parent=35 // pred_check_branch
          %289 = sbr.rel (%p287) target = $region40
        $region39: #{tpu_custom_call.1} parent=35 // pred_region
          %s290 = sand.u32 %s34, 1
          %s291 = scalar_lea.sflag [#allocation4], %s290
          %s292 = sand.u32 %s34, 1
          %s293 = smul.addr %s292, 8
          %s294 = scalar_lea.vmem [#allocation3], %s293
          %s296 = ssub.s32 128, 128
          %297 = vsyncadd %s291, %s296
          %s298 = smul.addr %s24, 128
          %s299 = scalar_lea.hbm %s0, %s298
          %s301 = sshll.u32 %s294, 4
          %s302 = int_to_ptr.vmem [resolvable:$true] %s301
          %304 = dma.hbm_to_vmem [thread:$0]  %s299, 128, %s302, %s291
        $region40: #{tpu_custom_call.1} parent=35 // pred_fallthru
          _
        // Predicated region
        $region41: #{tpu_custom_call.1} parent=35 // pred_check
          %p305 = pneg %p70
        $region42: #{tpu_custom_call.1} parent=35 // pred_check_branch
          %307 = sbr.rel (%p305) target = $region44
        $region43: #{tpu_custom_call.1} parent=35 // pred_region
          %p308 = scmp.lt.s32.totalorder %s24, 1
          %s309 = scalar_select %p308, %s24, 1
          %s310 = smul.addr %s309, 2
          %s311 = smul.addr %s310, 8
          %s312 = scalar_lea.vmem %s1, %s311
        $region44: #{tpu_custom_call.1} parent=35 // pred_fallthru
          _
        // Predicated region
        $region45: #{tpu_custom_call.1} parent=35 // pred_check
          %p313 = pneg %p96
        $region46: #{tpu_custom_call.1} parent=35 // pred_check_branch
          %315 = sbr.rel (%p313) target = $region48
        $region47: #{tpu_custom_call.1} parent=35 // pred_region
          %s316 = sand.u32 %s24, 1
          %s317 = scalar_lea.sflag [#allocation7], %s316
          %s318 = sand.u32 %s86, 1
          %s319 = smul.addr %s318, 16
          %s320 = scalar_lea.vmem [#allocation6], %s319
          %s322 = ssub.s32 256, 256
          %323 = vsyncadd %s317, %s322
          %s324 = smul.addr %s24, 2
          %s325 = smul.addr %s324, 128
          %s326 = scalar_lea.hbm %s2, %s325
          %s327 = sshll.u32 %s320, 4
          %s328 = int_to_ptr.vmem [resolvable:$true] %s327
          %333 = dma.hbm_to_vmem [thread:$0]  %s326, 256, %s328, %s317, 128, 128, 8
        $region48: #{tpu_custom_call.1} parent=35 // pred_fallthru
          _
      $region36: #{tpu_custom_call.1} parent=5 // pred_fallthru
        _
      %p334 = scmp.le.s32.totalorder 1, %s24
      %p335 = scmp.lt.s32.totalorder %s24, 3
      %p336 = pnand %p334, %p335
      %p337 = pneg %p336
      // Predicated region
      $region49: #{tpu_custom_call.1} parent=5 // pred_check
        _
      $region50: #{tpu_custom_call.1} parent=5 // pred_check_branch
        %339 = sbr.rel (%p336) target = $region52
      $region51: #{tpu_custom_call.1} parent=5 // pred_region
        %s340 = ssub.s32 %s24, 1
        %s341 = sand.u32 %s37, 1
        %s342 = scalar_lea.sflag [#allocation4], %s341
        %s343 = sand.u32 %s37, 1
        %s344 = smul.addr %s343, 8
        %s345 = scalar_lea.vmem [#allocation3], %s344
        // Predicated region
        $region53: #{tpu_custom_call.1} parent=51 // pred_check
          %p346 = pneg %p50
        $region54: #{tpu_custom_call.1} parent=51 // pred_check_branch
          %348 = sbr.rel (%p346) target = $region56
        $region55: #{tpu_custom_call.1} parent=51 // pred_region
          %349 = dma.done %s342, 128
        $region56: #{tpu_custom_call.1} parent=51 // pred_fallthru
          _
        %s350 = sand.u32 %s29, 1
        %s351 = scalar_lea.sflag [#allocation7], %s350
        %s352 = sand.u32 %s89, 1
        %s353 = smul.addr %s352, 16
        %s354 = scalar_lea.vmem [#allocation6], %s353
        // Predicated region
        $region57: #{tpu_custom_call.1} parent=51 // pred_check
          %p355 = pneg %p102
        $region58: #{tpu_custom_call.1} parent=51 // pred_check_branch
          %357 = sbr.rel (%p355) target = $region60
        $region59: #{tpu_custom_call.1} parent=51 // pred_region
          %358 = dma.done %s351, 256
        $region60: #{tpu_custom_call.1} parent=51 // pred_fallthru
          _
        // Predicated region
        $region61: #{tpu_custom_call.1} parent=51 // pred_check
          %p359 = pneg %p123
        $region62: #{tpu_custom_call.1} parent=51 // pred_check_branch
          %361 = sbr.rel (%p359) target = $region64
        $region63: #{tpu_custom_call.1} parent=51 // pred_region
          %362 = dma.done [#allocation7], 512
        $region64: #{tpu_custom_call.1} parent=51 // pred_fallthru
          _
        // Predicated region
        $region65: #{tpu_custom_call.1} parent=51 // pred_check
          %p363 = pneg %p144
        $region66: #{tpu_custom_call.1} parent=51 // pred_check_branch
          %365 = sbr.rel (%p363) target = $region68
        $region67: #{tpu_custom_call.1} parent=51 // pred_region
          %366 = dma.done [#allocation10], 512
        $region68: #{tpu_custom_call.1} parent=51 // pred_fallthru
          _
        %s367 = sand.u32 %s37, 1
        %s368 = scalar_lea.sflag [#allocation4], %s367
        %s369 = sand.u32 %s37, 1
        %s370 = smul.addr %s369, 8
        %s371 = scalar_lea.vmem [#allocation3], %s370
        %p372 = pneg %p50
        %p373 = pneg %p47
        %p374 = scmp.lt.s32.totalorder %s29, 1
        %s375 = scalar_select %p374, %s29, 1
        %s376 = smul.addr %s375, 2
        %s377 = smul.addr %s376, 8
        %s378 = scalar_lea.vmem %s1, %s377
        %p379 = pneg %p76
        %p380 = pneg %p73
        %s381 = sand.u32 %s29, 1
        %s382 = scalar_lea.sflag [#allocation7], %s381
        %s383 = sand.u32 %s89, 1
        %s384 = smul.addr %s383, 16
        %s385 = scalar_lea.vmem [#allocation6], %s384
        %p386 = pneg %p102
        %p387 = pneg %p99
        %p388 = pneg %p123
        %p389 = pneg %p120
        %p390 = pneg %p144
        %p391 = pneg %p141
        %p392 = pneg %p165
        %p393 = pneg %p162
        %p394 = pneg %p186
        %p395 = pneg %p183
        %p396 = pneg %p207
        %p397 = pneg %p204
        %p398 = pneg %p233
        %p399 = pneg %p230
        %s400 = sand.u32 %s220, 1
        %s401 = scalar_lea.sflag [#allocation5], %s400
        %s402 = sand.u32 %s220, 1
        %s403 = smul.addr %s402, 8
        %s404 = scalar_lea.vmem [#allocation11], %s403
        %p405 = scmp.lt.s32.totalorder %s29, 1
        %s406 = scalar_select %p405, %s29, 1
        %s407 = smul.addr %s406, 2
        %s408 = smul.addr %s407, 8
        %s409 = scalar_lea.vmem %s1, %s408
        %v410 = vld [vmem:[%s345] sm:$0xff]
        %v411 = vld [vmem:[%s409] sm:$0xff]
        %v412 = vld [vmem:[%s409 + $0x8] sm:$0xff]
        %v413 = vld [vmem:[%s354] sm:$0xff]
        %v414 = vld [vmem:[%s354 + $0x8] sm:$0xff]
        %v415 = vld [vmem:[#allocation8] sm:$0xff]
        %v416 = vld [vmem:[#allocation8 + $0x8] sm:$0xff]
        %v417 = vld [vmem:[#allocation8 + $0x10] sm:$0xff]
        %v418 = vld [vmem:[#allocation8 + $0x18] sm:$0xff]
        %vm419 = vcmask 261120
        %v421 = vsel %vm419, %v410, 0
        %423 = vmatprep.subr.mxu0 0.0
        %424 = vmatpush1.msra.mxu0 0.0
        %425 = vmatprep.subr.mxu0 0.0
        %426 = vmatpush1.msra.mxu0 0.0
        %427 = vmatprep.subr.mxu0 0.0
        %428 = vmatpush1.msra.mxu0 0.0
        %429 = vmatprep.subr.mxu0 0.0
        %430 = vmatpush1.msra.mxu0 0.0
        %431 = vmatprep.subr.mxu0 0.0
        %432 = vmatpush1.msra.mxu0 0.0
        %433 = vmatprep.subr.mxu0 0.0
        %434 = vmatpush1.msra.mxu0 0.0
        %435 = vmatprep.subr.mxu0 0.0
        %436 = vmatpush1.msra.mxu0 0.0
        %437 = vmatprep.subr.mxu0 0.0
        %438 = vmatpush1.msra.mxu0 0.0
        %439 = vmatprep.subr.mxu0 0.0
        %440 = vmatpush1.msra.mxu0 0.0
        %441 = vmatprep.subr.mxu0 0.0
        %442 = vmatpush1.msra.mxu0 0.0
        %443 = vmatprep.subr.mxu0 0.0
        %444 = vmatpush1.msra.mxu0 0.0
        %445 = vmatprep.subr.mxu0 0.0
        %446 = vmatpush1.msra.mxu0 0.0
        %447 = vmatprep.subr.mxu0 0.0
        %448 = vmatpush1.msra.mxu0 %v418
        %449 = vmatprep.subr.mxu0 0.0
        %450 = vmatpush1.msra.mxu0 %v417
        %451 = vmatprep.subr.mxu0 0.0
        %452 = vmatpush1.msra.mxu0 %v416
        %453 = vmatprep.subr.mxu0 0.0
        %454 = vmatpush1.msra.mxu0 %v415
        %455 = vmatprep.subr.mxu0 0.0
        %456 = vmatpush2.msra.mxu0 0.0
        %457 = vmatprep.subr.mxu0 0.0
        %458 = vmatpush2.msra.mxu0 0.0
        %459 = vmatprep.subr.mxu0 0.0
        %460 = vmatpush2.msra.mxu0 0.0
        %461 = vmatprep.subr.mxu0 0.0
        %462 = vmatpush2.msra.mxu0 0.0
        %463 = vmatprep.subr.mxu0 0.0
        %464 = vmatpush2.msra.mxu0 0.0
        %465 = vmatprep.subr.mxu0 0.0
        %466 = vmatpush2.msra.mxu0 0.0
        %467 = vmatprep.subr.mxu0 0.0
        %468 = vmatpush2.msra.mxu0 0.0
        %469 = vmatprep.subr.mxu0 0.0
        %470 = vmatpush2.msra.mxu0 0.0
        %471 = vmatprep.subr.mxu0 0.0
        %472 = vmatpush2.msra.mxu0 0.0
        %473 = vmatprep.subr.mxu0 0.0
        %474 = vmatpush2.msra.mxu0 0.0
        %475 = vmatprep.subr.mxu0 0.0
        %476 = vmatpush2.msra.mxu0 0.0
        %477 = vmatprep.subr.mxu0 0.0
        %478 = vmatpush2.msra.mxu0 0.0
        %479 = vmatprep.subr.mxu0 0.0
        %480 = vmatpush2.msra.mxu0 0.0
        %481 = vmatprep.subr.mxu0 0.0
        %482 = vmatpush2.msra.mxu0 0.0
        %483 = vmatprep.subr.mxu0 0.0
        %484 = vmatpush2.msra.mxu0 0.0
        %485 = vmatprep.subr.mxu0 0.0
        %486 = vmatpush2.msra.mxu0 0.0
        %487 = vmatprep.mubr.f32.mxu0 0.0
        %488 = vmatmul.mubr.f32.gmra.mxu0 %v421
        %v489 = vpop.f32.mrf.mxu0
        %v490 = vadd.f32 0.0, %v489
        %v491 = vpop.f32.mrf.mxu0
        %492 = vdwg.mxu0
        %v493 = vld [vmem:[#allocation9] sm:$0xff]
        %v494 = vld [vmem:[#allocation9 + $0x8] sm:$0xff]
        %v495 = vld [vmem:[#allocation9 + $0x10] sm:$0xff]
        %v496 = vld [vmem:[#allocation9 + $0x18] sm:$0xff]
        %v498 = vsel %vm419, %v411, 0
        %v501 = vsel %vm419, %v412, 0
        %503 = vmatprep.subr.mxu0 0.0
        %504 = vmatpush1.msra.mxu0 0.0
        %505 = vmatprep.subr.mxu0 0.0
        %506 = vmatpush1.msra.mxu0 0.0
        %507 = vmatprep.subr.mxu0 0.0
        %508 = vmatpush1.msra.mxu0 0.0
        %509 = vmatprep.subr.mxu0 0.0
        %510 = vmatpush1.msra.mxu0 0.0
        %511 = vmatprep.subr.mxu0 0.0
        %512 = vmatpush1.msra.mxu0 0.0
        %513 = vmatprep.subr.mxu0 0.0
        %514 = vmatpush1.msra.mxu0 0.0
        %515 = vmatprep.subr.mxu0 0.0
        %516 = vmatpush1.msra.mxu0 0.0
        %517 = vmatprep.subr.mxu0 0.0
        %518 = vmatpush1.msra.mxu0 0.0
        %519 = vmatprep.subr.mxu0 0.0
        %520 = vmatpush1.msra.mxu0 0.0
        %521 = vmatprep.subr.mxu0 0.0
        %522 = vmatpush1.msra.mxu0 0.0
        %523 = vmatprep.subr.mxu0 0.0
        %524 = vmatpush1.msra.mxu0 0.0
        %525 = vmatprep.subr.mxu0 0.0
        %526 = vmatpush1.msra.mxu0 0.0
        %527 = vmatprep.subr.mxu0 0.0
        %528 = vmatpush1.msra.mxu0 %v496
        %529 = vmatprep.subr.mxu0 0.0
        %530 = vmatpush1.msra.mxu0 %v495
        %531 = vmatprep.subr.mxu0 0.0
        %532 = vmatpush1.msra.mxu0 %v494
        %533 = vmatprep.subr.mxu0 0.0
        %534 = vmatpush1.msra.mxu0 %v493
        %535 = vmatprep.subr.mxu0 0.0
        %536 = vmatpush2.msra.mxu0 0.0
        %537 = vmatprep.subr.mxu0 0.0
        %538 = vmatpush2.msra.mxu0 0.0
        %539 = vmatprep.subr.mxu0 0.0
        %540 = vmatpush2.msra.mxu0 0.0
        %541 = vmatprep.subr.mxu0 0.0
        %542 = vmatpush2.msra.mxu0 0.0
        %543 = vmatprep.subr.mxu0 0.0
        %544 = vmatpush2.msra.mxu0 0.0
        %545 = vmatprep.subr.mxu0 0.0
        %546 = vmatpush2.msra.mxu0 0.0
        %547 = vmatprep.subr.mxu0 0.0
        %548 = vmatpush2.msra.mxu0 0.0
        %549 = vmatprep.subr.mxu0 0.0
        %550 = vmatpush2.msra.mxu0 0.0
        %551 = vmatprep.subr.mxu0 0.0
        %552 = vmatpush2.msra.mxu0 0.0
        %553 = vmatprep.subr.mxu0 0.0
        %554 = vmatpush2.msra.mxu0 0.0
        %555 = vmatprep.subr.mxu0 0.0
        %556 = vmatpush2.msra.mxu0 0.0
        %557 = vmatprep.subr.mxu0 0.0
        %558 = vmatpush2.msra.mxu0 0.0
        %559 = vmatprep.subr.mxu0 0.0
        %560 = vmatpush2.msra.mxu0 0.0
        %561 = vmatprep.subr.mxu0 0.0
        %562 = vmatpush2.msra.mxu0 0.0
        %563 = vmatprep.subr.mxu0 0.0
        %564 = vmatpush2.msra.mxu0 0.0
        %565 = vmatprep.subr.mxu0 0.0
        %566 = vmatpush2.msra.mxu0 0.0
        %567 = vmatprep.mubr.f32.mxu0 0.0
        %568 = vmatmul.mubr.f32.gmra.mxu0 %v498
        %v569 = vpop.f32.mrf.mxu0
        %v570 = vadd.f32 0.0, %v569
        %v571 = vpop.f32.mrf.mxu0
        %572 = vmatprep.mubr.f32.mxu0 0.0
        %573 = vmatmul.mubr.f32.gmra.mxu0 %v501
        %v574 = vpop.f32.mrf.mxu0
        %v575 = vadd.f32 0.0, %v574
        %v576 = vpop.f32.mrf.mxu0
        %577 = vdwg.mxu0
        %v578 = vld [vmem:[%s5] sm:$0xff]
        %v579 = vld [vmem:[%s5 + $0x8] sm:$0xff]
        %v580 = vld [vmem:[%s5 + $0x10] sm:$0xff]
        %v581 = vld [vmem:[%s5 + $0x18] sm:$0xff]
        %v582 = vld [vmem:[%s5 + $0x20] sm:$0xff]
        %v583 = vld [vmem:[%s5 + $0x28] sm:$0xff]
        %v584 = vld [vmem:[%s5 + $0x30] sm:$0xff]
        %v585 = vld [vmem:[%s5 + $0x38] sm:$0xff]
        %vm586 = vcmask 523264
        %v588 = vsel %vm586, %v413, 0
        %v591 = vsel %vm586, %v414, 0
        %593 = vmatprep.subr.mxu0 0.0
        %594 = vmatpush1.msra.mxu0 0.0
        %595 = vmatprep.subr.mxu0 0.0
        %596 = vmatpush1.msra.mxu0 0.0
        %597 = vmatprep.subr.mxu0 0.0
        %598 = vmatpush1.msra.mxu0 0.0
        %599 = vmatprep.subr.mxu0 0.0
        %600 = vmatpush1.msra.mxu0 0.0
        %601 = vmatprep.subr.mxu0 0.0
        %602 = vmatpush1.msra.mxu0 0.0
        %603 = vmatprep.subr.mxu0 0.0
        %604 = vmatpush1.msra.mxu0 0.0
        %605 = vmatprep.subr.mxu0 0.0
        %606 = vmatpush1.msra.mxu0 0.0
        %607 = vmatprep.subr.mxu0 0.0
        %608 = vmatpush1.msra.mxu0 0.0
        %609 = vmatprep.subr.mxu0 0.0
        %610 = vmatpush1.msra.mxu0 %v585
        %611 = vmatprep.subr.mxu0 0.0
        %612 = vmatpush1.msra.mxu0 %v584
        %613 = vmatprep.subr.mxu0 0.0
        %614 = vmatpush1.msra.mxu0 %v583
        %615 = vmatprep.subr.mxu0 0.0
        %616 = vmatpush1.msra.mxu0 %v582
        %617 = vmatprep.subr.mxu0 0.0
        %618 = vmatpush1.msra.mxu0 %v581
        %619 = vmatprep.subr.mxu0 0.0
        %620 = vmatpush1.msra.mxu0 %v580
        %621 = vmatprep.subr.mxu0 0.0
        %622 = vmatpush1.msra.mxu0 %v579
        %623 = vmatprep.subr.mxu0 0.0
        %624 = vmatpush1.msra.mxu0 %v578
        %625 = vmatprep.subr.mxu0 0.0
        %626 = vmatpush2.msra.mxu0 0.0
        %627 = vmatprep.subr.mxu0 0.0
        %628 = vmatpush2.msra.mxu0 0.0
        %629 = vmatprep.subr.mxu0 0.0
        %630 = vmatpush2.msra.mxu0 0.0
        %631 = vmatprep.subr.mxu0 0.0
        %632 = vmatpush2.msra.mxu0 0.0
        %633 = vmatprep.subr.mxu0 0.0
        %634 = vmatpush2.msra.mxu0 0.0
        %635 = vmatprep.subr.mxu0 0.0
        %636 = vmatpush2.msra.mxu0 0.0
        %637 = vmatprep.subr.mxu0 0.0
        %638 = vmatpush2.msra.mxu0 0.0
        %639 = vmatprep.subr.mxu0 0.0
        %640 = vmatpush2.msra.mxu0 0.0
        %641 = vmatprep.subr.mxu0 0.0
        %642 = vmatpush2.msra.mxu0 0.0
        %643 = vmatprep.subr.mxu0 0.0
        %644 = vmatpush2.msra.mxu0 0.0
        %645 = vmatprep.subr.mxu0 0.0
        %646 = vmatpush2.msra.mxu0 0.0
        %647 = vmatprep.subr.mxu0 0.0
        %648 = vmatpush2.msra.mxu0 0.0
        %649 = vmatprep.subr.mxu0 0.0
        %650 = vmatpush2.msra.mxu0 0.0
        %651 = vmatprep.subr.mxu0 0.0
        %652 = vmatpush2.msra.mxu0 0.0
        %653 = vmatprep.subr.mxu0 0.0
        %654 = vmatpush2.msra.mxu0 0.0
        %655 = vmatprep.subr.mxu0 0.0
        %656 = vmatpush2.msra.mxu0 0.0
        %657 = vmatprep.mubr.f32.mxu0 0.0
        %658 = vmatmul.mubr.f32.gmra.mxu0 %v588
        %v659 = vpop.f32.mrf.mxu0
        %v660 = vadd.f32 0.0, %v659
        %v661 = vpop.f32.mrf.mxu0
        %662 = vmatprep.mubr.f32.mxu0 0.0
        %663 = vmatmul.mubr.f32.gmra.mxu0 %v591
        %v664 = vpop.f32.mrf.mxu0
        %v665 = vadd.f32 0.0, %v664
        %v666 = vpop.f32.mrf.mxu0
        %667 = vdwg.mxu0
        %vm668 = vcmask 64512
        %v670 = vsel %vm668, %v490, 0
        %v673 = vsel %vm668, %v570, 0
        %v676 = vsel %vm668, %v575, 0
        %678 = vmatprep.subr.mxu0 0.0
        %679 = vmatpush1.xpose.msra.mxu0 0.0
        %680 = vmatprep.subr.mxu0 0.0
        %681 = vmatpush1.xpose.msra.mxu0 0.0
        %682 = vmatprep.subr.mxu0 0.0
        %683 = vmatpush1.xpose.msra.mxu0 0.0
        %684 = vmatprep.subr.mxu0 0.0
        %685 = vmatpush1.xpose.msra.mxu0 0.0
        %686 = vmatprep.subr.mxu0 0.0
        %687 = vmatpush1.xpose.msra.mxu0 0.0
        %688 = vmatprep.subr.mxu0 0.0
        %689 = vmatpush1.xpose.msra.mxu0 0.0
        %690 = vmatprep.subr.mxu0 0.0
        %691 = vmatpush1.xpose.msra.mxu0 0.0
        %692 = vmatprep.subr.mxu0 0.0
        %693 = vmatpush1.xpose.msra.mxu0 0.0
        %694 = vmatprep.subr.mxu0 0.0
        %695 = vmatpush1.xpose.msra.mxu0 0.0
        %696 = vmatprep.subr.mxu0 0.0
        %697 = vmatpush1.xpose.msra.mxu0 0.0
        %698 = vmatprep.subr.mxu0 0.0
        %699 = vmatpush1.xpose.msra.mxu0 0.0
        %700 = vmatprep.subr.mxu0 0.0
        %701 = vmatpush1.xpose.msra.mxu0 0.0
        %702 = vmatprep.subr.mxu0 0.0
        %703 = vmatpush1.xpose.msra.mxu0 0.0
        %704 = vmatprep.subr.mxu0 0.0
        %705 = vmatpush1.xpose.msra.mxu0 0.0
        %706 = vmatprep.subr.mxu0 0.0
        %707 = vmatpush1.xpose.msra.mxu0 %v676
        %708 = vmatprep.subr.mxu0 0.0
        %709 = vmatpush1.xpose.msra.mxu0 %v673
        %710 = vmatprep.subr.mxu0 0.0
        %711 = vmatpush2.xpose.msra.mxu0 0.0
        %712 = vmatprep.subr.mxu0 0.0
        %713 = vmatpush2.xpose.msra.mxu0 0.0
        %714 = vmatprep.subr.mxu0 0.0
        %715 = vmatpush2.xpose.msra.mxu0 0.0
        %716 = vmatprep.subr.mxu0 0.0
        %717 = vmatpush2.xpose.msra.mxu0 0.0
        %718 = vmatprep.subr.mxu0 0.0
        %719 = vmatpush2.xpose.msra.mxu0 0.0
        %720 = vmatprep.subr.mxu0 0.0
        %721 = vmatpush2.xpose.msra.mxu0 0.0
        %722 = vmatprep.subr.mxu0 0.0
        %723 = vmatpush2.xpose.msra.mxu0 0.0
        %724 = vmatprep.subr.mxu0 0.0
        %725 = vmatpush2.xpose.msra.mxu0 0.0
        %726 = vmatprep.subr.mxu0 0.0
        %727 = vmatpush2.xpose.msra.mxu0 0.0
        %728 = vmatprep.subr.mxu0 0.0
        %729 = vmatpush2.xpose.msra.mxu0 0.0
        %730 = vmatprep.subr.mxu0 0.0
        %731 = vmatpush2.xpose.msra.mxu0 0.0
        %732 = vmatprep.subr.mxu0 0.0
        %733 = vmatpush2.xpose.msra.mxu0 0.0
        %734 = vmatprep.subr.mxu0 0.0
        %735 = vmatpush2.xpose.msra.mxu0 0.0
        %736 = vmatprep.subr.mxu0 0.0
        %737 = vmatpush2.xpose.msra.mxu0 0.0
        %738 = vmatprep.subr.mxu0 0.0
        %739 = vmatpush2.xpose.msra.mxu0 0.0
        %740 = vmatprep.subr.mxu0 0.0
        %741 = vmatpush2.xpose.msra.mxu0 0.0
        %742 = vmatprep.mubr.f32.mxu0 0.0
        %743 = vmatmul.mubr.f32.gmra.mxu0 %v670
        %v744 = vpop.f32.mrf.mxu0
        %v745 = vadd.f32 0.0, %v744
        %v746 = vpop.f32.mrf.mxu0
        %747 = vdwg.mxu0
        %v748 = vmul.f32 %v745, 0.35355338
        %vm749 = vcmask 130048
        %v750 = vsel %vm749, %v748, -inf
        %751 = vmax.xlane.f32.xlu0 %v750
        %v752 = vpop.xlane.xlu0 %751
        %v753 = vsub.f32 %v748, %v752
        %v754 = vmul.f32 %v753, 1.442695
        %v755 = vpow.pop %v754
        %v756 = vsel %vm749, %v755, 0.0
        %757 = vadd.xlane.f32.xlu0 %v756
        %v758 = vpop.xlane.xlu0 %757
        %v759 = vrcp.pop %v758
        %v760 = vmul.f32 %v755, %v759
        %v762 = vsel %vm749, %v760, 0
        %764 = vmatprep.subr.mxu0 0.0
        %765 = vmatpush1.msra.mxu0 0.0
        %766 = vmatprep.subr.mxu0 0.0
        %767 = vmatpush1.msra.mxu0 0.0
        %768 = vmatprep.subr.mxu0 0.0
        %769 = vmatpush1.msra.mxu0 0.0
        %770 = vmatprep.subr.mxu0 0.0
        %771 = vmatpush1.msra.mxu0 0.0
        %772 = vmatprep.subr.mxu0 0.0
        %773 = vmatpush1.msra.mxu0 0.0
        %774 = vmatprep.subr.mxu0 0.0
        %775 = vmatpush1.msra.mxu0 0.0
        %776 = vmatprep.subr.mxu0 0.0
        %777 = vmatpush1.msra.mxu0 0.0
        %778 = vmatprep.subr.mxu0 0.0
        %779 = vmatpush1.msra.mxu0 0.0
        %780 = vmatprep.subr.mxu0 0.0
        %781 = vmatpush1.msra.mxu0 0.0
        %782 = vmatprep.subr.mxu0 0.0
        %783 = vmatpush1.msra.mxu0 0.0
        %784 = vmatprep.subr.mxu0 0.0
        %785 = vmatpush1.msra.mxu0 0.0
        %786 = vmatprep.subr.mxu0 0.0
        %787 = vmatpush1.msra.mxu0 0.0
        %788 = vmatprep.subr.mxu0 0.0
        %789 = vmatpush1.msra.mxu0 0.0
        %790 = vmatprep.subr.mxu0 0.0
        %791 = vmatpush1.msra.mxu0 0.0
        %792 = vmatprep.subr.mxu0 0.0
        %793 = vmatpush1.msra.mxu0 %v665
        %794 = vmatprep.subr.mxu0 0.0
        %795 = vmatpush1.msra.mxu0 %v660
        %796 = vmatprep.subr.mxu0 0.0
        %797 = vmatpush2.msra.mxu0 0.0
        %798 = vmatprep.subr.mxu0 0.0
        %799 = vmatpush2.msra.mxu0 0.0
        %800 = vmatprep.subr.mxu0 0.0
        %801 = vmatpush2.msra.mxu0 0.0
        %802 = vmatprep.subr.mxu0 0.0
        %803 = vmatpush2.msra.mxu0 0.0
        %804 = vmatprep.subr.mxu0 0.0
        %805 = vmatpush2.msra.mxu0 0.0
        %806 = vmatprep.subr.mxu0 0.0
        %807 = vmatpush2.msra.mxu0 0.0
        %808 = vmatprep.subr.mxu0 0.0
        %809 = vmatpush2.msra.mxu0 0.0
        %810 = vmatprep.subr.mxu0 0.0
        %811 = vmatpush2.msra.mxu0 0.0
        %812 = vmatprep.subr.mxu0 0.0
        %813 = vmatpush2.msra.mxu0 0.0
        %814 = vmatprep.subr.mxu0 0.0
        %815 = vmatpush2.msra.mxu0 0.0
        %816 = vmatprep.subr.mxu0 0.0
        %817 = vmatpush2.msra.mxu0 0.0
        %818 = vmatprep.subr.mxu0 0.0
        %819 = vmatpush2.msra.mxu0 0.0
        %820 = vmatprep.subr.mxu0 0.0
        %821 = vmatpush2.msra.mxu0 0.0
        %822 = vmatprep.subr.mxu0 0.0
        %823 = vmatpush2.msra.mxu0 0.0
        %824 = vmatprep.subr.mxu0 0.0
        %825 = vmatpush2.msra.mxu0 0.0
        %826 = vmatprep.subr.mxu0 0.0
        %827 = vmatpush2.msra.mxu0 0.0
        %828 = vmatprep.mubr.f32.mxu0 0.0
        %829 = vmatmul.mubr.f32.gmra.mxu0 %v762
        %v830 = vpop.f32.mrf.mxu0
        %v831 = vadd.f32 0.0, %v830
        %v832 = vpop.f32.mrf.mxu0
        %833 = vdwg.mxu0
        %834 = vst.msk [vmem:[#allocation2] sm:$0xff] %vm749, %v831
        %835 = vrot.lane.b32.xlu0 %v490, 120
        %v836 = vpop.permute.xlu0 %835
        %837 = vrot.lane.b32.xlu0 %v570, 120
        %v838 = vpop.permute.xlu0 %837
        %839 = vrot.lane.b32.xlu0 %v575, 120
        %v840 = vpop.permute.xlu0 %839
        %v841 = vsel %vm668, %v836, 0
        %v843 = vsel %vm668, %v838, 0
        %v845 = vsel %vm668, %v840, 0
        %847 = vmatprep.subr.mxu0 0.0
        %848 = vmatpush1.xpose.msra.mxu0 0.0
        %849 = vmatprep.subr.mxu0 0.0
        %850 = vmatpush1.xpose.msra.mxu0 0.0
        %851 = vmatprep.subr.mxu0 0.0
        %852 = vmatpush1.xpose.msra.mxu0 0.0
        %853 = vmatprep.subr.mxu0 0.0
        %854 = vmatpush1.xpose.msra.mxu0 0.0
        %855 = vmatprep.subr.mxu0 0.0
        %856 = vmatpush1.xpose.msra.mxu0 0.0
        %857 = vmatprep.subr.mxu0 0.0
        %858 = vmatpush1.xpose.msra.mxu0 0.0
        %859 = vmatprep.subr.mxu0 0.0
        %860 = vmatpush1.xpose.msra.mxu0 0.0
        %861 = vmatprep.subr.mxu0 0.0
        %862 = vmatpush1.xpose.msra.mxu0 0.0
        %863 = vmatprep.subr.mxu0 0.0
        %864 = vmatpush1.xpose.msra.mxu0 0.0
        %865 = vmatprep.subr.mxu0 0.0
        %866 = vmatpush1.xpose.msra.mxu0 0.0
        %867 = vmatprep.subr.mxu0 0.0
        %868 = vmatpush1.xpose.msra.mxu0 0.0
        %869 = vmatprep.subr.mxu0 0.0
        %870 = vmatpush1.xpose.msra.mxu0 0.0
        %871 = vmatprep.subr.mxu0 0.0
        %872 = vmatpush1.xpose.msra.mxu0 0.0
        %873 = vmatprep.subr.mxu0 0.0
        %874 = vmatpush1.xpose.msra.mxu0 0.0
        %875 = vmatprep.subr.mxu0 0.0
        %876 = vmatpush1.xpose.msra.mxu0 %v845
        %877 = vmatprep.subr.mxu0 0.0
        %878 = vmatpush1.xpose.msra.mxu0 %v843
        %879 = vmatprep.subr.mxu0 0.0
        %880 = vmatpush2.xpose.msra.mxu0 0.0
        %881 = vmatprep.subr.mxu0 0.0
        %882 = vmatpush2.xpose.msra.mxu0 0.0
        %883 = vmatprep.subr.mxu0 0.0
        %884 = vmatpush2.xpose.msra.mxu0 0.0
        %885 = vmatprep.subr.mxu0 0.0
        %886 = vmatpush2.xpose.msra.mxu0 0.0
        %887 = vmatprep.subr.mxu0 0.0
        %888 = vmatpush2.xpose.msra.mxu0 0.0
        %889 = vmatprep.subr.mxu0 0.0
        %890 = vmatpush2.xpose.msra.mxu0 0.0
        %891 = vmatprep.subr.mxu0 0.0
        %892 = vmatpush2.xpose.msra.mxu0 0.0
        %893 = vmatprep.subr.mxu0 0.0
        %894 = vmatpush2.xpose.msra.mxu0 0.0
        %895 = vmatprep.subr.mxu0 0.0
        %896 = vmatpush2.xpose.msra.mxu0 0.0
        %897 = vmatprep.subr.mxu0 0.0
        %898 = vmatpush2.xpose.msra.mxu0 0.0
        %899 = vmatprep.subr.mxu0 0.0
        %900 = vmatpush2.xpose.msra.mxu0 0.0
        %901 = vmatprep.subr.mxu0 0.0
        %902 = vmatpush2.xpose.msra.mxu0 0.0
        %903 = vmatprep.subr.mxu0 0.0
        %904 = vmatpush2.xpose.msra.mxu0 0.0
        %905 = vmatprep.subr.mxu0 0.0
        %906 = vmatpush2.xpose.msra.mxu0 0.0
        %907 = vmatprep.subr.mxu0 0.0
        %908 = vmatpush2.xpose.msra.mxu0 0.0
        %909 = vmatprep.subr.mxu0 0.0
        %910 = vmatpush2.xpose.msra.mxu0 0.0
        %911 = vmatprep.mubr.f32.mxu0 0.0
        %912 = vmatmul.mubr.f32.gmra.mxu0 %v841
        %v913 = vpop.f32.mrf.mxu0
        %v914 = vadd.f32 0.0, %v913
        %v915 = vpop.f32.mrf.mxu0
        %916 = vdwg.mxu0
        %v917 = vmul.f32 %v914, 0.35355338
        %v918 = vsel %vm749, %v917, -inf
        %919 = vmax.xlane.f32.xlu0 %v918
        %v920 = vpop.xlane.xlu0 %919
        %v921 = vsub.f32 %v917, %v920
        %v922 = vmul.f32 %v921, 1.442695
        %v923 = vpow.pop %v922
        %v924 = vsel %vm749, %v923, 0.0
        %925 = vadd.xlane.f32.xlu0 %v924
        %v926 = vpop.xlane.xlu0 %925
        %v927 = vrcp.pop %v926
        %v928 = vmul.f32 %v923, %v927
        %931 = vrot.lane.b32.xlu0 %v660, 112
        %v932 = vpop.permute.xlu0 %931
        %933 = vrot.lane.b32.xlu0 %v665, 112
        %v934 = vpop.permute.xlu0 %933
        %v938 = vsel %vm749, %v928, 0
        %940 = vmatprep.subr.mxu0 0.0
        %941 = vmatpush1.msra.mxu0 0.0
        %942 = vmatprep.subr.mxu0 0.0
        %943 = vmatpush1.msra.mxu0 0.0
        %944 = vmatprep.subr.mxu0 0.0
        %945 = vmatpush1.msra.mxu0 0.0
        %946 = vmatprep.subr.mxu0 0.0
        %947 = vmatpush1.msra.mxu0 0.0
        %948 = vmatprep.subr.mxu0 0.0
        %949 = vmatpush1.msra.mxu0 0.0
        %950 = vmatprep.subr.mxu0 0.0
        %951 = vmatpush1.msra.mxu0 0.0
        %952 = vmatprep.subr.mxu0 0.0
        %953 = vmatpush1.msra.mxu0 0.0
        %954 = vmatprep.subr.mxu0 0.0
        %955 = vmatpush1.msra.mxu0 0.0
        %956 = vmatprep.subr.mxu0 0.0
        %957 = vmatpush1.msra.mxu0 0.0
        %958 = vmatprep.subr.mxu0 0.0
        %959 = vmatpush1.msra.mxu0 0.0
        %960 = vmatprep.subr.mxu0 0.0
        %961 = vmatpush1.msra.mxu0 0.0
        %962 = vmatprep.subr.mxu0 0.0
        %963 = vmatpush1.msra.mxu0 0.0
        %964 = vmatprep.subr.mxu0 0.0
        %965 = vmatpush1.msra.mxu0 0.0
        %966 = vmatprep.subr.mxu0 0.0
        %967 = vmatpush1.msra.mxu0 0.0
        %968 = vmatprep.subr.mxu0 0.0
        %969 = vmatpush1.msra.mxu0 %v934
        %970 = vmatprep.subr.mxu0 0.0
        %971 = vmatpush1.msra.mxu0 %v932
        %972 = vmatprep.subr.mxu0 0.0
        %973 = vmatpush2.msra.mxu0 0.0
        %974 = vmatprep.subr.mxu0 0.0
        %975 = vmatpush2.msra.mxu0 0.0
        %976 = vmatprep.subr.mxu0 0.0
        %977 = vmatpush2.msra.mxu0 0.0
        %978 = vmatprep.subr.mxu0 0.0
        %979 = vmatpush2.msra.mxu0 0.0
        %980 = vmatprep.subr.mxu0 0.0
        %981 = vmatpush2.msra.mxu0 0.0
        %982 = vmatprep.subr.mxu0 0.0
        %983 = vmatpush2.msra.mxu0 0.0
        %984 = vmatprep.subr.mxu0 0.0
        %985 = vmatpush2.msra.mxu0 0.0
        %986 = vmatprep.subr.mxu0 0.0
        %987 = vmatpush2.msra.mxu0 0.0
        %988 = vmatprep.subr.mxu0 0.0
        %989 = vmatpush2.msra.mxu0 0.0
        %990 = vmatprep.subr.mxu0 0.0
        %991 = vmatpush2.msra.mxu0 0.0
        %992 = vmatprep.subr.mxu0 0.0
        %993 = vmatpush2.msra.mxu0 0.0
        %994 = vmatprep.subr.mxu0 0.0
        %995 = vmatpush2.msra.mxu0 0.0
        %996 = vmatprep.subr.mxu0 0.0
        %997 = vmatpush2.msra.mxu0 0.0
        %998 = vmatprep.subr.mxu0 0.0
        %999 = vmatpush2.msra.mxu0 0.0
        %1000 = vmatprep.subr.mxu0 0.0
        %1001 = vmatpush2.msra.mxu0 0.0
        %1002 = vmatprep.subr.mxu0 0.0
        %1003 = vmatpush2.msra.mxu0 0.0
        %1004 = vmatprep.mubr.f32.mxu0 0.0
        %1005 = vmatmul.mubr.f32.gmra.mxu0 %v938
        %v1006 = vpop.f32.mrf.mxu0
        %v1007 = vadd.f32 0.0, %v1006
        %v1008 = vpop.f32.mrf.mxu0
        %1009 = vdwg.mxu0
        %1011 = vrot.lane.b32.xlu0 %v1007, 16
        %v1012 = vpop.permute.xlu0 %1011
        %vm1014 = vcmask 261248
        %1015 = vst.msk [vmem:[#allocation2] sm:$0xff] %vm1014, %v1012
        %1016 = vrot.lane.b32.xlu0 %v490, 112
        %v1017 = vpop.permute.xlu0 %1016
        %1018 = vrot.lane.b32.xlu0 %v570, 112
        %v1019 = vpop.permute.xlu0 %1018
        %1020 = vrot.lane.b32.xlu0 %v575, 112
        %v1021 = vpop.permute.xlu0 %1020
        %v1022 = vsel %vm668, %v1017, 0
        %v1024 = vsel %vm668, %v1019, 0
        %v1026 = vsel %vm668, %v1021, 0
        %1028 = vmatprep.subr.mxu0 0.0
        %1029 = vmatpush1.xpose.msra.mxu0 0.0
        %1030 = vmatprep.subr.mxu0 0.0
        %1031 = vmatpush1.xpose.msra.mxu0 0.0
        %1032 = vmatprep.subr.mxu0 0.0
        %1033 = vmatpush1.xpose.msra.mxu0 0.0
        %1034 = vmatprep.subr.mxu0 0.0
        %1035 = vmatpush1.xpose.msra.mxu0 0.0
        %1036 = vmatprep.subr.mxu0 0.0
        %1037 = vmatpush1.xpose.msra.mxu0 0.0
        %1038 = vmatprep.subr.mxu0 0.0
        %1039 = vmatpush1.xpose.msra.mxu0 0.0
        %1040 = vmatprep.subr.mxu0 0.0
        %1041 = vmatpush1.xpose.msra.mxu0 0.0
        %1042 = vmatprep.subr.mxu0 0.0
        %1043 = vmatpush1.xpose.msra.mxu0 0.0
        %1044 = vmatprep.subr.mxu0 0.0
        %1045 = vmatpush1.xpose.msra.mxu0 0.0
        %1046 = vmatprep.subr.mxu0 0.0
        %1047 = vmatpush1.xpose.msra.mxu0 0.0
        %1048 = vmatprep.subr.mxu0 0.0
        %1049 = vmatpush1.xpose.msra.mxu0 0.0
        %1050 = vmatprep.subr.mxu0 0.0
        %1051 = vmatpush1.xpose.msra.mxu0 0.0
        %1052 = vmatprep.subr.mxu0 0.0
        %1053 = vmatpush1.xpose.msra.mxu0 0.0
        %1054 = vmatprep.subr.mxu0 0.0
        %1055 = vmatpush1.xpose.msra.mxu0 0.0
        %1056 = vmatprep.subr.mxu0 0.0
        %1057 = vmatpush1.xpose.msra.mxu0 %v1026
        %1058 = vmatprep.subr.mxu0 0.0
        %1059 = vmatpush1.xpose.msra.mxu0 %v1024
        %1060 = vmatprep.subr.mxu0 0.0
        %1061 = vmatpush2.xpose.msra.mxu0 0.0
        %1062 = vmatprep.subr.mxu0 0.0
        %1063 = vmatpush2.xpose.msra.mxu0 0.0
        %1064 = vmatprep.subr.mxu0 0.0
        %1065 = vmatpush2.xpose.msra.mxu0 0.0
        %1066 = vmatprep.subr.mxu0 0.0
        %1067 = vmatpush2.xpose.msra.mxu0 0.0
        %1068 = vmatprep.subr.mxu0 0.0
        %1069 = vmatpush2.xpose.msra.mxu0 0.0
        %1070 = vmatprep.subr.mxu0 0.0
        %1071 = vmatpush2.xpose.msra.mxu0 0.0
        %1072 = vmatprep.subr.mxu0 0.0
        %1073 = vmatpush2.xpose.msra.mxu0 0.0
        %1074 = vmatprep.subr.mxu0 0.0
        %1075 = vmatpush2.xpose.msra.mxu0 0.0
        %1076 = vmatprep.subr.mxu0 0.0
        %1077 = vmatpush2.xpose.msra.mxu0 0.0
        %1078 = vmatprep.subr.mxu0 0.0
        %1079 = vmatpush2.xpose.msra.mxu0 0.0
        %1080 = vmatprep.subr.mxu0 0.0
        %1081 = vmatpush2.xpose.msra.mxu0 0.0
        %1082 = vmatprep.subr.mxu0 0.0
        %1083 = vmatpush2.xpose.msra.mxu0 0.0
        %1084 = vmatprep.subr.mxu0 0.0
        %1085 = vmatpush2.xpose.msra.mxu0 0.0
        %1086 = vmatprep.subr.mxu0 0.0
        %1087 = vmatpush2.xpose.msra.mxu0 0.0
        %1088 = vmatprep.subr.mxu0 0.0
        %1089 = vmatpush2.xpose.msra.mxu0 0.0
        %1090 = vmatprep.subr.mxu0 0.0
        %1091 = vmatpush2.xpose.msra.mxu0 0.0
        %1092 = vmatprep.mubr.f32.mxu0 0.0
        %1093 = vmatmul.mubr.f32.gmra.mxu0 %v1022
        %v1094 = vpop.f32.mrf.mxu0
        %v1095 = vadd.f32 0.0, %v1094
        %v1096 = vpop.f32.mrf.mxu0
        %1097 = vdwg.mxu0
        %v1098 = vmul.f32 %v1095, 0.35355338
        %v1099 = vsel %vm749, %v1098, -inf
        %1100 = vmax.xlane.f32.xlu0 %v1099
        %v1101 = vpop.xlane.xlu0 %1100
        %v1102 = vsub.f32 %v1098, %v1101
        %v1103 = vmul.f32 %v1102, 1.442695
        %v1104 = vpow.pop %v1103
        %v1105 = vsel %vm749, %v1104, 0.0
        %1106 = vadd.xlane.f32.xlu0 %v1105
        %v1107 = vpop.xlane.xlu0 %1106
        %v1108 = vrcp.pop %v1107
        %v1109 = vmul.f32 %v1104, %v1108
        %1110 = vrot.lane.b32.xlu0 %v660, 96
        %v1111 = vpop.permute.xlu0 %1110
        %1112 = vrot.lane.b32.xlu0 %v665, 96
        %v1113 = vpop.permute.xlu0 %1112
        %v1117 = vsel %vm749, %v1109, 0
        %1119 = vmatprep.subr.mxu0 0.0
        %1120 = vmatpush1.msra.mxu0 0.0
        %1121 = vmatprep.subr.mxu0 0.0
        %1122 = vmatpush1.msra.mxu0 0.0
        %1123 = vmatprep.subr.mxu0 0.0
        %1124 = vmatpush1.msra.mxu0 0.0
        %1125 = vmatprep.subr.mxu0 0.0
        %1126 = vmatpush1.msra.mxu0 0.0
        %1127 = vmatprep.subr.mxu0 0.0
        %1128 = vmatpush1.msra.mxu0 0.0
        %1129 = vmatprep.subr.mxu0 0.0
        %1130 = vmatpush1.msra.mxu0 0.0
        %1131 = vmatprep.subr.mxu0 0.0
        %1132 = vmatpush1.msra.mxu0 0.0
        %1133 = vmatprep.subr.mxu0 0.0
        %1134 = vmatpush1.msra.mxu0 0.0
        %1135 = vmatprep.subr.mxu0 0.0
        %1136 = vmatpush1.msra.mxu0 0.0
        %1137 = vmatprep.subr.mxu0 0.0
        %1138 = vmatpush1.msra.mxu0 0.0
        %1139 = vmatprep.subr.mxu0 0.0
        %1140 = vmatpush1.msra.mxu0 0.0
        %1141 = vmatprep.subr.mxu0 0.0
        %1142 = vmatpush1.msra.mxu0 0.0
        %1143 = vmatprep.subr.mxu0 0.0
        %1144 = vmatpush1.msra.mxu0 0.0
        %1145 = vmatprep.subr.mxu0 0.0
        %1146 = vmatpush1.msra.mxu0 0.0
        %1147 = vmatprep.subr.mxu0 0.0
        %1148 = vmatpush1.msra.mxu0 %v1113
        %1149 = vmatprep.subr.mxu0 0.0
        %1150 = vmatpush1.msra.mxu0 %v1111
        %1151 = vmatprep.subr.mxu0 0.0
        %1152 = vmatpush2.msra.mxu0 0.0
        %1153 = vmatprep.subr.mxu0 0.0
        %1154 = vmatpush2.msra.mxu0 0.0
        %1155 = vmatprep.subr.mxu0 0.0
        %1156 = vmatpush2.msra.mxu0 0.0
        %1157 = vmatprep.subr.mxu0 0.0
        %1158 = vmatpush2.msra.mxu0 0.0
        %1159 = vmatprep.subr.mxu0 0.0
        %1160 = vmatpush2.msra.mxu0 0.0
        %1161 = vmatprep.subr.mxu0 0.0
        %1162 = vmatpush2.msra.mxu0 0.0
        %1163 = vmatprep.subr.mxu0 0.0
        %1164 = vmatpush2.msra.mxu0 0.0
        %1165 = vmatprep.subr.mxu0 0.0
        %1166 = vmatpush2.msra.mxu0 0.0
        %1167 = vmatprep.subr.mxu0 0.0
        %1168 = vmatpush2.msra.mxu0 0.0
        %1169 = vmatprep.subr.mxu0 0.0
        %1170 = vmatpush2.msra.mxu0 0.0
        %1171 = vmatprep.subr.mxu0 0.0
        %1172 = vmatpush2.msra.mxu0 0.0
        %1173 = vmatprep.subr.mxu0 0.0
        %1174 = vmatpush2.msra.mxu0 0.0
        %1175 = vmatprep.subr.mxu0 0.0
        %1176 = vmatpush2.msra.mxu0 0.0
        %1177 = vmatprep.subr.mxu0 0.0
        %1178 = vmatpush2.msra.mxu0 0.0
        %1179 = vmatprep.subr.mxu0 0.0
        %1180 = vmatpush2.msra.mxu0 0.0
        %1181 = vmatprep.subr.mxu0 0.0
        %1182 = vmatpush2.msra.mxu0 0.0
        %1183 = vmatprep.mubr.f32.mxu0 0.0
        %1184 = vmatmul.mubr.f32.gmra.mxu0 %v1117
        %v1185 = vpop.f32.mrf.mxu0
        %v1186 = vadd.f32 0.0, %v1185
        %v1187 = vpop.f32.mrf.mxu0
        %1188 = vdwg.mxu0
        %1190 = vrot.lane.b32.xlu0 %v1186, 32
        %v1191 = vpop.permute.xlu0 %1190
        %vm1193 = vcmask 392448
        %1194 = vst.msk [vmem:[#allocation2] sm:$0xff] %vm1193, %v1191
        %1195 = vrot.lane.b32.xlu0 %v490, 104
        %v1196 = vpop.permute.xlu0 %1195
        %1197 = vrot.lane.b32.xlu0 %v570, 104
        %v1198 = vpop.permute.xlu0 %1197
        %1199 = vrot.lane.b32.xlu0 %v575, 104
        %v1200 = vpop.permute.xlu0 %1199
        %v1201 = vsel %vm668, %v1196, 0
        %v1203 = vsel %vm668, %v1198, 0
        %v1205 = vsel %vm668, %v1200, 0
        %1207 = vmatprep.subr.mxu0 0.0
        %1208 = vmatpush1.xpose.msra.mxu0 0.0
        %1209 = vmatprep.subr.mxu0 0.0
        %1210 = vmatpush1.xpose.msra.mxu0 0.0
        %1211 = vmatprep.subr.mxu0 0.0
        %1212 = vmatpush1.xpose.msra.mxu0 0.0
        %1213 = vmatprep.subr.mxu0 0.0
        %1214 = vmatpush1.xpose.msra.mxu0 0.0
        %1215 = vmatprep.subr.mxu0 0.0
        %1216 = vmatpush1.xpose.msra.mxu0 0.0
        %1217 = vmatprep.subr.mxu0 0.0
        %1218 = vmatpush1.xpose.msra.mxu0 0.0
        %1219 = vmatprep.subr.mxu0 0.0
        %1220 = vmatpush1.xpose.msra.mxu0 0.0
        %1221 = vmatprep.subr.mxu0 0.0
        %1222 = vmatpush1.xpose.msra.mxu0 0.0
        %1223 = vmatprep.subr.mxu0 0.0
        %1224 = vmatpush1.xpose.msra.mxu0 0.0
        %1225 = vmatprep.subr.mxu0 0.0
        %1226 = vmatpush1.xpose.msra.mxu0 0.0
        %1227 = vmatprep.subr.mxu0 0.0
        %1228 = vmatpush1.xpose.msra.mxu0 0.0
        %1229 = vmatprep.subr.mxu0 0.0
        %1230 = vmatpush1.xpose.msra.mxu0 0.0
        %1231 = vmatprep.subr.mxu0 0.0
        %1232 = vmatpush1.xpose.msra.mxu0 0.0
        %1233 = vmatprep.subr.mxu0 0.0
        %1234 = vmatpush1.xpose.msra.mxu0 0.0
        %1235 = vmatprep.subr.mxu0 0.0
        %1236 = vmatpush1.xpose.msra.mxu0 %v1205
        %1237 = vmatprep.subr.mxu0 0.0
        %1238 = vmatpush1.xpose.msra.mxu0 %v1203
        %1239 = vmatprep.subr.mxu0 0.0
        %1240 = vmatpush2.xpose.msra.mxu0 0.0
        %1241 = vmatprep.subr.mxu0 0.0
        %1242 = vmatpush2.xpose.msra.mxu0 0.0
        %1243 = vmatprep.subr.mxu0 0.0
        %1244 = vmatpush2.xpose.msra.mxu0 0.0
        %1245 = vmatprep.subr.mxu0 0.0
        %1246 = vmatpush2.xpose.msra.mxu0 0.0
        %1247 = vmatprep.subr.mxu0 0.0
        %1248 = vmatpush2.xpose.msra.mxu0 0.0
        %1249 = vmatprep.subr.mxu0 0.0
        %1250 = vmatpush2.xpose.msra.mxu0 0.0
        %1251 = vmatprep.subr.mxu0 0.0
        %1252 = vmatpush2.xpose.msra.mxu0 0.0
        %1253 = vmatprep.subr.mxu0 0.0
        %1254 = vmatpush2.xpose.msra.mxu0 0.0
        %1255 = vmatprep.subr.mxu0 0.0
        %1256 = vmatpush2.xpose.msra.mxu0 0.0
        %1257 = vmatprep.subr.mxu0 0.0
        %1258 = vmatpush2.xpose.msra.mxu0 0.0
        %1259 = vmatprep.subr.mxu0 0.0
        %1260 = vmatpush2.xpose.msra.mxu0 0.0
        %1261 = vmatprep.subr.mxu0 0.0
        %1262 = vmatpush2.xpose.msra.mxu0 0.0
        %1263 = vmatprep.subr.mxu0 0.0
        %1264 = vmatpush2.xpose.msra.mxu0 0.0
        %1265 = vmatprep.subr.mxu0 0.0
        %1266 = vmatpush2.xpose.msra.mxu0 0.0
        %1267 = vmatprep.subr.mxu0 0.0
        %1268 = vmatpush2.xpose.msra.mxu0 0.0
        %1269 = vmatprep.subr.mxu0 0.0
        %1270 = vmatpush2.xpose.msra.mxu0 0.0
        %1271 = vmatprep.mubr.f32.mxu0 0.0
        %1272 = vmatmul.mubr.f32.gmra.mxu0 %v1201
        %v1273 = vpop.f32.mrf.mxu0
        %v1274 = vadd.f32 0.0, %v1273
        %v1275 = vpop.f32.mrf.mxu0
        %1276 = vdwg.mxu0
        %v1277 = vmul.f32 %v1274, 0.35355338
        %v1278 = vsel %vm749, %v1277, -inf
        %1279 = vmax.xlane.f32.xlu0 %v1278
        %v1280 = vpop.xlane.xlu0 %1279
        %v1281 = vsub.f32 %v1277, %v1280
        %v1282 = vmul.f32 %v1281, 1.442695
        %v1283 = vpow.pop %v1282
        %v1284 = vsel %vm749, %v1283, 0.0
        %1285 = vadd.xlane.f32.xlu0 %v1284
        %v1286 = vpop.xlane.xlu0 %1285
        %v1287 = vrcp.pop %v1286
        %v1288 = vmul.f32 %v1283, %v1287
        %1289 = vrot.lane.b32.xlu0 %v660, 80
        %v1290 = vpop.permute.xlu0 %1289
        %1291 = vrot.lane.b32.xlu0 %v665, 80
        %v1292 = vpop.permute.xlu0 %1291
        %v1296 = vsel %vm749, %v1288, 0
        %1298 = vmatprep.subr.mxu0 0.0
        %1299 = vmatpush1.msra.mxu0 0.0
        %1300 = vmatprep.subr.mxu0 0.0
        %1301 = vmatpush1.msra.mxu0 0.0
        %1302 = vmatprep.subr.mxu0 0.0
        %1303 = vmatpush1.msra.mxu0 0.0
        %1304 = vmatprep.subr.mxu0 0.0
        %1305 = vmatpush1.msra.mxu0 0.0
        %1306 = vmatprep.subr.mxu0 0.0
        %1307 = vmatpush1.msra.mxu0 0.0
        %1308 = vmatprep.subr.mxu0 0.0
        %1309 = vmatpush1.msra.mxu0 0.0
        %1310 = vmatprep.subr.mxu0 0.0
        %1311 = vmatpush1.msra.mxu0 0.0
        %1312 = vmatprep.subr.mxu0 0.0
        %1313 = vmatpush1.msra.mxu0 0.0
        %1314 = vmatprep.subr.mxu0 0.0
        %1315 = vmatpush1.msra.mxu0 0.0
        %1316 = vmatprep.subr.mxu0 0.0
        %1317 = vmatpush1.msra.mxu0 0.0
        %1318 = vmatprep.subr.mxu0 0.0
        %1319 = vmatpush1.msra.mxu0 0.0
        %1320 = vmatprep.subr.mxu0 0.0
        %1321 = vmatpush1.msra.mxu0 0.0
        %1322 = vmatprep.subr.mxu0 0.0
        %1323 = vmatpush1.msra.mxu0 0.0
        %1324 = vmatprep.subr.mxu0 0.0
        %1325 = vmatpush1.msra.mxu0 0.0
        %1326 = vmatprep.subr.mxu0 0.0
        %1327 = vmatpush1.msra.mxu0 %v1292
        %1328 = vmatprep.subr.mxu0 0.0
        %1329 = vmatpush1.msra.mxu0 %v1290
        %1330 = vmatprep.subr.mxu0 0.0
        %1331 = vmatpush2.msra.mxu0 0.0
        %1332 = vmatprep.subr.mxu0 0.0
        %1333 = vmatpush2.msra.mxu0 0.0
        %1334 = vmatprep.subr.mxu0 0.0
        %1335 = vmatpush2.msra.mxu0 0.0
        %1336 = vmatprep.subr.mxu0 0.0
        %1337 = vmatpush2.msra.mxu0 0.0
        %1338 = vmatprep.subr.mxu0 0.0
        %1339 = vmatpush2.msra.mxu0 0.0
        %1340 = vmatprep.subr.mxu0 0.0
        %1341 = vmatpush2.msra.mxu0 0.0
        %1342 = vmatprep.subr.mxu0 0.0
        %1343 = vmatpush2.msra.mxu0 0.0
        %1344 = vmatprep.subr.mxu0 0.0
        %1345 = vmatpush2.msra.mxu0 0.0
        %1346 = vmatprep.subr.mxu0 0.0
        %1347 = vmatpush2.msra.mxu0 0.0
        %1348 = vmatprep.subr.mxu0 0.0
        %1349 = vmatpush2.msra.mxu0 0.0
        %1350 = vmatprep.subr.mxu0 0.0
        %1351 = vmatpush2.msra.mxu0 0.0
        %1352 = vmatprep.subr.mxu0 0.0
        %1353 = vmatpush2.msra.mxu0 0.0
        %1354 = vmatprep.subr.mxu0 0.0
        %1355 = vmatpush2.msra.mxu0 0.0
        %1356 = vmatprep.subr.mxu0 0.0
        %1357 = vmatpush2.msra.mxu0 0.0
        %1358 = vmatprep.subr.mxu0 0.0
        %1359 = vmatpush2.msra.mxu0 0.0
        %1360 = vmatprep.subr.mxu0 0.0
        %1361 = vmatpush2.msra.mxu0 0.0
        %1362 = vmatprep.mubr.f32.mxu0 0.0
        %1363 = vmatmul.mubr.f32.gmra.mxu0 %v1296
        %v1364 = vpop.f32.mrf.mxu0
        %v1365 = vadd.f32 0.0, %v1364
        %v1366 = vpop.f32.mrf.mxu0
        %1367 = vdwg.mxu0
        %1369 = vrot.lane.b32.xlu0 %v1365, 48
        %v1370 = vpop.permute.xlu0 %1369
        %vm1372 = vcmask 523648
        %1373 = vst.msk [vmem:[#allocation2] sm:$0xff] %vm1372, %v1370
        %v1374 = vld [vmem:[#allocation2] sm:$0xff]
        %v1375 = vld [vmem:[%s6] sm:$0xff]
        %v1376 = vld [vmem:[%s6 + $0x8] sm:$0xff]
        %v1377 = vld [vmem:[%s6 + $0x10] sm:$0xff]
        %v1378 = vld [vmem:[%s6 + $0x18] sm:$0xff]
        %v1379 = vld [vmem:[%s6 + $0x20] sm:$0xff]
        %v1380 = vld [vmem:[%s6 + $0x28] sm:$0xff]
        %v1381 = vld [vmem:[%s6 + $0x30] sm:$0xff]
        %v1382 = vld [vmem:[%s6 + $0x38] sm:$0xff]
        %v1383 = vld [vmem:[%s7] sm:$0x1]
        %v1385 = vlaneseq
        %v1386 = vshrl.u32 %v1385, 7
        %v1387 = vsub.s32 0, %v1386
        %v1388 = vrot.slane %v1383, %v1387
        %v1391 = vsel %vm586, %v1374, 0
        %1393 = vmatprep.subr.mxu0 0.0
        %1394 = vmatpush1.msra.mxu0 0.0
        %1395 = vmatprep.subr.mxu0 0.0
        %1396 = vmatpush1.msra.mxu0 0.0
        %1397 = vmatprep.subr.mxu0 0.0
        %1398 = vmatpush1.msra.mxu0 0.0
        %1399 = vmatprep.subr.mxu0 0.0
        %1400 = vmatpush1.msra.mxu0 0.0
        %1401 = vmatprep.subr.mxu0 0.0
        %1402 = vmatpush1.msra.mxu0 0.0
        %1403 = vmatprep.subr.mxu0 0.0
        %1404 = vmatpush1.msra.mxu0 0.0
        %1405 = vmatprep.subr.mxu0 0.0
        %1406 = vmatpush1.msra.mxu0 0.0
        %1407 = vmatprep.subr.mxu0 0.0
        %1408 = vmatpush1.msra.mxu0 0.0
        %1409 = vmatprep.subr.mxu0 0.0
        %1410 = vmatpush1.msra.mxu0 %v1382
        %1411 = vmatprep.subr.mxu0 0.0
        %1412 = vmatpush1.msra.mxu0 %v1381
        %1413 = vmatprep.subr.mxu0 0.0
        %1414 = vmatpush1.msra.mxu0 %v1380
        %1415 = vmatprep.subr.mxu0 0.0
        %1416 = vmatpush1.msra.mxu0 %v1379
        %1417 = vmatprep.subr.mxu0 0.0
        %1418 = vmatpush1.msra.mxu0 %v1378
        %1419 = vmatprep.subr.mxu0 0.0
        %1420 = vmatpush1.msra.mxu0 %v1377
        %1421 = vmatprep.subr.mxu0 0.0
        %1422 = vmatpush1.msra.mxu0 %v1376
        %1423 = vmatprep.subr.mxu0 0.0
        %1424 = vmatpush1.msra.mxu0 %v1375
        %1425 = vmatprep.subr.mxu0 0.0
        %1426 = vmatpush2.msra.mxu0 0.0
        %1427 = vmatprep.subr.mxu0 0.0
        %1428 = vmatpush2.msra.mxu0 0.0
        %1429 = vmatprep.subr.mxu0 0.0
        %1430 = vmatpush2.msra.mxu0 0.0
        %1431 = vmatprep.subr.mxu0 0.0
        %1432 = vmatpush2.msra.mxu0 0.0
        %1433 = vmatprep.subr.mxu0 0.0
        %1434 = vmatpush2.msra.mxu0 0.0
        %1435 = vmatprep.subr.mxu0 0.0
        %1436 = vmatpush2.msra.mxu0 0.0
        %1437 = vmatprep.subr.mxu0 0.0
        %1438 = vmatpush2.msra.mxu0 0.0
        %1439 = vmatprep.subr.mxu0 0.0
        %1440 = vmatpush2.msra.mxu0 0.0
        %1441 = vmatprep.subr.mxu0 0.0
        %1442 = vmatpush2.msra.mxu0 0.0
        %1443 = vmatprep.subr.mxu0 0.0
        %1444 = vmatpush2.msra.mxu0 0.0
        %1445 = vmatprep.subr.mxu0 0.0
        %1446 = vmatpush2.msra.mxu0 0.0
        %1447 = vmatprep.subr.mxu0 0.0
        %1448 = vmatpush2.msra.mxu0 0.0
        %1449 = vmatprep.subr.mxu0 0.0
        %1450 = vmatpush2.msra.mxu0 0.0
        %1451 = vmatprep.subr.mxu0 0.0
        %1452 = vmatpush2.msra.mxu0 0.0
        %1453 = vmatprep.subr.mxu0 0.0
        %1454 = vmatpush2.msra.mxu0 0.0
        %1455 = vmatprep.subr.mxu0 0.0
        %1456 = vmatpush2.msra.mxu0 0.0
        %1457 = vmatprep.mubr.f32.mxu0 0.0
        %1458 = vmatmul.mubr.f32.gmra.mxu0 %v1391
        %v1459 = vpop.f32.mrf.mxu0
        %v1460 = vadd.f32 %v1388, %v1459
        %v1461 = vpop.f32.mrf.mxu0
        %1462 = vdwg.mxu0
        %1463 = vst.msk [vmem:[%s404] sm:$0xff] %vm419, %v1460
        %s1464 = sand.u32 %s220, 1
        %s1465 = scalar_lea.sflag [#allocation5], %s1464
        %s1466 = sand.u32 %s220, 1
        %s1467 = smul.addr %s1466, 8
        %s1468 = scalar_lea.vmem [#allocation11], %s1467
        // Predicated region
        $region69: #{tpu_custom_call.1} parent=51 // pred_check
          %p1469 = pneg %p230
        $region70: #{tpu_custom_call.1} parent=51 // pred_check_branch
          %1471 = sbr.rel (%p1469) target = $region72
        $region71: #{tpu_custom_call.1} parent=51 // pred_region
          %s1473 = ssub.s32 128, 128
          %1474 = vsyncadd %s1465, %s1473
          %s1475 = smul.addr %s29, 128
          %s1476 = scalar_lea.hbm %s8, %s1475
          %s1478 = sshll.u32 %s1468, 4
          %s1479 = int_to_ptr.vmem [resolvable:$true] %s1478
          %1481 = dma.vmem_to_hbm [thread:$0]  %s1479, 128, %s1476, %s1465
        $region72: #{tpu_custom_call.1} parent=51 // pred_fallthru
          _
      $region52: #{tpu_custom_call.1} parent=5 // pred_fallthru
        _
      %p1482 = scmp.le.s32.totalorder 2, %s24
      // Predicated region
      $region73: #{tpu_custom_call.1} parent=5 // pred_check
        %p1483 = pneg %p1482
      $region74: #{tpu_custom_call.1} parent=5 // pred_check_branch
        %1485 = sbr.rel (%p1483) target = $region76
      $region75: #{tpu_custom_call.1} parent=5 // pred_region
        %s1486 = ssub.s32 %s24, 2
        // Predicated region
        $region77: #{tpu_custom_call.1} parent=75 // pred_check
          %p1487 = pneg %p236
        $region78: #{tpu_custom_call.1} parent=75 // pred_check_branch
          %1489 = sbr.rel (%p1487) target = $region80
        $region79: #{tpu_custom_call.1} parent=75 // pred_region
          %s1490 = sand.u32 %s221, 1
          %s1491 = scalar_lea.sflag [#allocation5], %s1490
          %s1492 = sand.u32 %s221, 1
          %s1493 = smul.addr %s1492, 8
          %s1494 = scalar_lea.vmem [#allocation11], %s1493
          %1495 = dma.done %s1491, 128
        $region80: #{tpu_custom_call.1} parent=75 // pred_fallthru
          _
      $region76: #{tpu_custom_call.1} parent=5 // pred_fallthru
        _
    $region6: #{tpu_custom_call.1} parent=1 // loop_footer
      %s28 = sadd.s32 1, %s24
    $region7: #{tpu_custom_call.1} parent=1 // loop_footer_branch
      %23 = sbr.rel target = $region3
    $region8: #{tpu_custom_call.1} parent=1 // loop_exit
      _
    %1496 = vsyncpa [#allocation4], 1
    %s1497 = scalar_lea.sflag [#allocation4], 1
    %1498 = vsyncpa %s1497, 1
    %1499 = vsyncpa [#allocation7], 1
    %s1500 = scalar_lea.sflag [#allocation7], 1
    %1501 = vsyncpa %s1500, 1
    %1502 = vsyncpa [#allocation10], 1
    %1503 = vsyncpa [#allocation5], 1
    %s1504 = scalar_lea.sflag [#allocation5], 1
    %1505 = vsyncpa %s1504, 1

</llo_original>
